<compile_context>
chip_gen: v7x
topology: tpu7x:2x2x1
jax: 0.10.0
libtpu: 0.0.40
codegen_flags: <defaults>
</compile_context>

<pallas_src>
import numpy as np
import jax
import jax.numpy as jnp
from jax.experimental import pallas as pl
from jax.experimental.pallas import tpu as pltpu


# ---------------------------------------------------------------------------
# Fused kernel: GATv2Conv(heads=1) + bias + ReLU + mean-pool + Linear + softmax
# (one grid step = one graph-batch)
# ---------------------------------------------------------------------------
def simple_net_kernel(x_ref, wlr_ref, blr_ref, att_ref, adj_ref, bias_ref,
                      pool_ref, wc_ref, bc_ref, out_ref, pooled_ref):
    H = bias_ref.shape[1]

    # fused projection: one matmul for both lin_l and lin_r
    x = x_ref[0]                                                                        # (N, F)
    xlr = jnp.dot(x, wlr_ref[...], preferred_element_type=jnp.float32) + blr_ref[...]   # (N, 2H)
    xl = xlr[:, :H]                                                                     # source feats
    xr = xlr[:, H:]                                                                     # target feats
    xlT = xl.T                                                                          # (H, N)

    # hoisted per-head attention scalars (SMEM reads ahead of the VPU chain)
    att = [att_ref[0, h] for h in range(H)]

    # adjacency arrives as int8 {0,1}; expand to the additive bias in-kernel:
    # 0 on edges (incl. self-loops), -1e30 elsewhere (kept in f32).
    adj_f = adj_ref[0].astype(jnp.float32)                                              # (N, N)
    e_bias = (adj_f - 1.0) * jnp.float32(1e30)

    # GATv2 logits: e[i, j] = sum_h att[h] * LeakyReLU(xr[i, h] + xl[j, h]);
    # i = target (sublanes), j = source (lanes).  Static unroll over H accumulated into
    # 4 independent chains so the scheduler can co-issue across the 4 VALU slots.
    NCHAIN = 4
    parts = [None] * NCHAIN
    for h in range(H):
        pair = xr[:, h:h + 1] + xlT[h:h + 1, :]                                         # (N,1)+(1,N) -> (N,N)
        pair = jnp.maximum(pair, 0.2 * pair)                                            # LeakyReLU(0.2)
        term = att[h] * pair
        c = h % NCHAIN
        parts[c] = term if parts[c] is None else parts[c] + term
    chains = [p for p in parts if p is not None]
    while len(chains) > 1:                                                              # tree-sum the chains
        nxt = [chains[i] + chains[i + 1] for i in range(0, len(chains) - 1, 2)]
        if len(chains) % 2:
            nxt.append(chains[-1])
        chains = nxt
    e = e_bias + chains[0]

    # masked softmax over sources j.  Self-loops guarantee a finite max per row, so the
    # -1e30 entries underflow to exactly 0 after the max-subtract (a fully isolated node
    # would get uniform attention instead of the PyG reference's NaN).
    m = jnp.max(e, axis=1, keepdims=True)
    p = jnp.exp(e - m)
    alpha = p * pl.reciprocal(jnp.sum(p, axis=1, keepdims=True), approx=True)           # (N, N)

    h_nodes = jnp.dot(alpha, xl, preferred_element_type=jnp.float32) + bias_ref[...]    # (N, H)
    h_nodes = jnp.maximum(h_nodes, 0.0)                                                 # ReLU
    # TODO(synk): Dropout(p=0.2) is identity in eval mode; training-mode RNG masking not emitted.

    # global_mean_pool (1/count pooling matrix) + Linear + softmax
    pooled = jnp.dot(pool_ref[0], h_nodes, preferred_element_type=jnp.float32)          # (G, H)
    logits = jnp.dot(pooled, wc_ref[...], preferred_element_type=jnp.float32) + bc_ref[...]  # (G, C)
    mm = jnp.max(logits, axis=1, keepdims=True)
    q = jnp.exp(logits - mm)
    out_ref[0] = q / jnp.sum(q, axis=1, keepdims=True)    # exact: probabilities sum to 1
    pooled_ref[0] = pooled


def simple_net(x, adj_i8, pool, wlr, blr, att, bias, wc, bc):
    """Fused, batched forward pass.

    x       (NB, N, F)  node features, NB graph-batches of N nodes
    adj_i8  (NB, N, N)  int8 adjacency incl. self-loops, adj[b, target, source]
    pool    (NB, G, N)  mean-pool matrix per batch (G graphs per batch)
    wlr     (F, 2H)     concat of GATv2 lin_l | lin_r weights
    blr     (1, 2H)     concat of lin_l | lin_r biases
    att     (1, H)      GATv2 attention vector
    bias    (1, H)      GATv2 output bias
    wc, bc              classifier weight / bias
    """
    NB, N, F = x.shape
    H = bias.shape[1]
    C = wc.shape[1]
    G = pool.shape[1]
    # TODO(synk): at production N, row-tile adj/alpha (flash-style streaming over source tiles)
    # and set vmem_limit_bytes explicitly (v7x 64 MiB VMEM / v5e 16 MiB scoped default), cast
    # MXU operands to bf16, and pack the (G,C)/(G,H) outputs into a lane-dense (mult-of-128) slab.
    return pl.pallas_call(
        simple_net_kernel,
        grid=(NB,),
        out_shape=(jax.ShapeDtypeStruct((NB, G, C), jnp.float32),
                   jax.ShapeDtypeStruct((NB, G, H), jnp.float32)),
        in_specs=[
            pl.BlockSpec((1, N, F), lambda b: (b, 0, 0)),            # x (per batch)
            pl.BlockSpec((F, 2 * H), lambda b: (0, 0)),              # wlr (shared)
            pl.BlockSpec((1, 2 * H), lambda b: (0, 0)),              # blr (shared)
            pl.BlockSpec(memory_space=pltpu.MemorySpace.SMEM),       # att scalars
            pl.BlockSpec((1, N, N), lambda b: (b, 0, 0)),            # adjacency (int8, per batch)
            pl.BlockSpec((1, H), lambda b: (0, 0)),                  # GATv2 output bias (shared)
            pl.BlockSpec((1, G, N), lambda b: (b, 0, 0)),            # pooling matrix (per batch)
            pl.BlockSpec((H, C), lambda b: (0, 0)),                  # classifier W (shared)
            pl.BlockSpec((1, C), lambda b: (0, 0)),                  # classifier b (shared)
        ],
        out_specs=(pl.BlockSpec((1, G, C), lambda b: (b, 0, 0)),
                   pl.BlockSpec((1, G, H), lambda b: (b, 0, 0))),
        compiler_params=pltpu.CompilerParams(dimension_semantics=("parallel",)),
    )(x, wlr, blr, att, adj_i8, bias, pool, wc, bc)


# ---------------------------------------------------------------------------
# pure-JAX reference (same math, per graph-batch) for a correctness check
# ---------------------------------------------------------------------------
def ref_forward(x, adj, pool, wl, wr, bl, br, att, bias, wc, bc):
    xl = x @ wl + bl
    xr = x @ wr + br
    s = xr[:, None, :] + xl[None, :, :]
    s = jnp.where(s > 0, s, 0.2 * s)
    e = jnp.sum(s * att[None, :, :], axis=-1)
    e = jnp.where(adj > 0, e, -jnp.inf)
    alpha = jax.nn.softmax(e, axis=1)
    h = jnp.maximum(alpha @ xl + bias, 0.0)
    pooled = pool @ h
    logits = pooled @ wc + bc
    return jax.nn.softmax(logits, axis=1), pooled


if __name__ == "__main__":
    NB, N, F, H, C, G = 4, 12, 16, 10, 4, 2   # 4 graph-batches x (2 graphs of 6 nodes), 16 feats

    key = jax.random.PRNGKey(0)
    ks = jax.random.split(key, 9)
    x    = jax.random.normal(ks[0], (NB, N, F), jnp.float32)
    wl   = jax.random.normal(ks[1], (F, H), jnp.float32) * 0.3   # GATv2 lin_l weight (F, H)
    wr   = jax.random.normal(ks[2], (F, H), jnp.float32) * 0.3   # GATv2 lin_r weight (F, H)
    bl   = jax.random.normal(ks[3], (1, H), jnp.float32) * 0.1
    br   = jax.random.normal(ks[4], (1, H), jnp.float32) * 0.1
    att  = jax.random.normal(ks[5], (1, H), jnp.float32) * 0.3   # attention vector a
    bias = jax.random.normal(ks[6], (1, H), jnp.float32) * 0.1   # GATv2 output bias
    wc   = jax.random.normal(ks[7], (H, C), jnp.float32) * 0.3   # classifier weight (H, C)
    bc   = jax.random.normal(ks[8], (1, C), jnp.float32) * 0.1   # classifier bias

    # fused projection weights (perf review: one matmul for lin_l + lin_r)
    wlr = jnp.concatenate([wl, wr], axis=1)          # (F, 2H)
    blr = jnp.concatenate([bl, br], axis=1)          # (1, 2H)

    # deterministic edges: bidirectional ring inside each of the G graphs of every batch,
    # plus self-loops (GATv2 add_self_loops=True).  adj[b, target, source] = 1, stored int8.
    nodes_per_graph = N // G
    adj_np = np.zeros((NB, N, N), np.int8)
    for b in range(NB):
        for g in range(G):
            base = g * nodes_per_graph
            for i in range(nodes_per_graph):
                u = base + i
                v = base + (i + 1) % nodes_per_graph
                adj_np[b, v, u] = 1
                adj_np[b, u, v] = 1
        adj_np[b, np.arange(N), np.arange(N)] = 1
    adj_i8 = jnp.asarray(adj_np)

    # mean-pool matrix: pool[b, g, n] = 1/|graph g| if node n belongs to graph g
    batch_vec = np.repeat(np.arange(G), nodes_per_graph)
    pool_np = np.zeros((G, N), np.float32)
    for g in range(G):
        msk = batch_vec == g
        pool_np[g, msk] = 1.0 / msk.sum()
    pool = jnp.asarray(np.tile(pool_np[None], (NB, 1, 1)))

    out, pooled = simple_net(x, adj_i8, pool, wlr, blr, att, bias, wc, bc)
    jax.block_until_ready((out, pooled))

    # pure-JAX reference (vmapped over graph-batches; weights broadcast)
    adj_f32 = jnp.asarray(adj_np.astype(np.float32))
    out_ref, pooled_ref = jax.vmap(
        ref_forward, in_axes=(0, 0, 0, None, None, None, None, None, None, None, None)
    )(x, adj_f32, pool, wl, wr, bl, br, att, bias, wc, bc)

    assert out.shape == (NB, G, C) and pooled.shape == (NB, G, H)
    # pl.reciprocal(approx=True) on the attention softmax => slightly loose tolerance
    assert np.allclose(np.asarray(out), np.asarray(out_ref), atol=2e-3, rtol=2e-3)
    assert np.allclose(np.asarray(pooled), np.asarray(pooled_ref), atol=2e-3, rtol=2e-3)

    print("KERNEL_OK")
</pallas_src>

<mosaic_0001>
module attributes {stable_mosaic.version = 11 : i64} {
  func.func @simple_net_kernel(%arg0: i32, %arg1: memref<1x12x16xf32, #tpu.memory_space<vmem>>, %arg2: memref<16x20xf32, #tpu.memory_space<vmem>>, %arg3: memref<1x20xf32, #tpu.memory_space<vmem>>, %arg4: memref<1x10xf32, #tpu.memory_space<smem>>, %arg5: memref<1x12x12xi8, #tpu.memory_space<vmem>>, %arg6: memref<1x10xf32, #tpu.memory_space<vmem>>, %arg7: memref<1x2x12xf32, #tpu.memory_space<vmem>>, %arg8: memref<10x4xf32, #tpu.memory_space<vmem>>, %arg9: memref<1x4xf32, #tpu.memory_space<vmem>>, %arg10: memref<1x2x4xf32, #tpu.memory_space<vmem>>, %arg11: memref<1x2x10xf32, #tpu.memory_space<vmem>>) attributes {dimension_semantics = [#tpu.dimension_semantics<parallel>], iteration_bounds = array<i64: 4>, scalar_prefetch = 0 : i64, scratch_operands = 0 : i64, tpu.core_type = #tpu.core_type<tc>, window_params = [{transform_indices = @transform_0, window_bounds = array<i64: 1, 12, 16>}, {pipeline_mode = #tpu.pipeline_mode<synchronous>, transform_indices = @transform_1, window_bounds = array<i64: 16, 20>}, {pipeline_mode = #tpu.pipeline_mode<synchronous>, transform_indices = @transform_2, window_bounds = array<i64: 1, 20>}, {transform_indices = @transform_3, window_bounds = array<i64: 1, 10>}, {transform_indices = @transform_4, window_bounds = array<i64: 1, 12, 12>}, {pipeline_mode = #tpu.pipeline_mode<synchronous>, transform_indices = @transform_5, window_bounds = array<i64: 1, 10>}, {transform_indices = @transform_6, window_bounds = array<i64: 1, 2, 12>}, {pipeline_mode = #tpu.pipeline_mode<synchronous>, transform_indices = @transform_7, window_bounds = array<i64: 10, 4>}, {pipeline_mode = #tpu.pipeline_mode<synchronous>, transform_indices = @transform_8, window_bounds = array<i64: 1, 4>}, {transform_indices = @transform_9, window_bounds = array<i64: 1, 2, 4>}, {transform_indices = @transform_10, window_bounds = array<i64: 1, 2, 10>}]} {
    %c0 = arith.constant 0 : index
    %c0_0 = arith.constant 0 : index
    %c0_1 = arith.constant 0 : index
    %0 = vector.load %arg1[%c0, %c0_0, %c0_1] : memref<1x12x16xf32, #tpu.memory_space<vmem>>, vector<1x12x16xf32>
    %1 = vector.shape_cast %0 : vector<1x12x16xf32> to vector<12x16xf32>
    %c0_2 = arith.constant 0 : index
    %c0_3 = arith.constant 0 : index
    %2 = vector.load %arg2[%c0_2, %c0_3] : memref<16x20xf32, #tpu.memory_space<vmem>>, vector<16x20xf32>
    %cst = arith.constant dense<0.000000e+00> : vector<12x20xf32>
    %3 = tpu.matmul %1, %2, %cst {dimension_numbers = #tpu.dot_dimension_numbers<[1], [0], [0], [1], [0, 0, 1, 1], [], []>} : vector<12x16xf32>, vector<16x20xf32>, vector<12x20xf32> -> vector<12x20xf32>
    %c0_4 = arith.constant 0 : index
    %c0_5 = arith.constant 0 : index
    %4 = vector.load %arg3[%c0_4, %c0_5] : memref<1x20xf32, #tpu.memory_space<vmem>>, vector<1x20xf32>
    %5 = vector.broadcast %4 : vector<1x20xf32> to vector<12x20xf32>
    %6 = arith.addf %3, %5 : vector<12x20xf32>
    %7 = vector.extract_strided_slice %6 {offsets = [0, 0], sizes = [12, 10], strides = [1, 1]} : vector<12x20xf32> to vector<12x10xf32>
    %8 = vector.extract_strided_slice %6 {offsets = [0, 10], sizes = [12, 10], strides = [1, 1]} : vector<12x20xf32> to vector<12x10xf32>
    %9 = tpu.transpose %7, [1, 0] : vector<12x10xf32> -> vector<10x12xf32>
    %c0_6 = arith.constant 0 : index
    %c0_7 = arith.constant 0 : index
    %10 = memref.load %arg4[%c0_6, %c0_7] : memref<1x10xf32, #tpu.memory_space<smem>>
    %c0_8 = arith.constant 0 : index
    %c1 = arith.constant 1 : index
    %11 = memref.load %arg4[%c0_8, %c1] : memref<1x10xf32, #tpu.memory_space<smem>>
    %c0_9 = arith.constant 0 : index
    %c2 = arith.constant 2 : index
    %12 = memref.load %arg4[%c0_9, %c2] : memref<1x10xf32, #tpu.memory_space<smem>>
    %c0_10 = arith.constant 0 : index
    %c3 = arith.constant 3 : index
    %13 = memref.load %arg4[%c0_10, %c3] : memref<1x10xf32, #tpu.memory_space<smem>>
    %c0_11 = arith.constant 0 : index
    %c4 = arith.constant 4 : index
    %14 = memref.load %arg4[%c0_11, %c4] : memref<1x10xf32, #tpu.memory_space<smem>>
    %c0_12 = arith.constant 0 : index
    %c5 = arith.constant 5 : index
    %15 = memref.load %arg4[%c0_12, %c5] : memref<1x10xf32, #tpu.memory_space<smem>>
    %c0_13 = arith.constant 0 : index
    %c6 = arith.constant 6 : index
    %16 = memref.load %arg4[%c0_13, %c6] : memref<1x10xf32, #tpu.memory_space<smem>>
    %c0_14 = arith.constant 0 : index
    %c7 = arith.constant 7 : index
    %17 = memref.load %arg4[%c0_14, %c7] : memref<1x10xf32, #tpu.memory_space<smem>>
    %c0_15 = arith.constant 0 : index
    %c8 = arith.constant 8 : index
    %18 = memref.load %arg4[%c0_15, %c8] : memref<1x10xf32, #tpu.memory_space<smem>>
    %c0_16 = arith.constant 0 : index
    %c9 = arith.constant 9 : index
    %19 = memref.load %arg4[%c0_16, %c9] : memref<1x10xf32, #tpu.memory_space<smem>>
    %c0_17 = arith.constant 0 : index
    %c0_18 = arith.constant 0 : index
    %c0_19 = arith.constant 0 : index
    %20 = vector.load %arg5[%c0_17, %c0_18, %c0_19] : memref<1x12x12xi8, #tpu.memory_space<vmem>>, vector<1x12x12xi8>
    %21 = vector.shape_cast %20 : vector<1x12x12xi8> to vector<12x12xi8>
    %22 = arith.sitofp %21 : vector<12x12xi8> to vector<12x12xf32>
    %cst_20 = arith.constant 1.000000e+00 : f32
    %23 = vector.broadcast %cst_20 : f32 to vector<12x12xf32>
    %24 = arith.subf %22, %23 : vector<12x12xf32>
    %cst_21 = arith.constant 1.000000e+30 : f32
    %25 = vector.broadcast %cst_21 : f32 to vector<12x12xf32>
    %26 = arith.mulf %24, %25 : vector<12x12xf32>
    %27 = vector.extract_strided_slice %8 {offsets = [0, 0], sizes = [12, 1], strides = [1, 1]} : vector<12x10xf32> to vector<12x1xf32>
    %28 = vector.extract_strided_slice %9 {offsets = [0, 0], sizes = [1, 12], strides = [1, 1]} : vector<10x12xf32> to vector<1x12xf32>
    %29 = vector.broadcast %27 : vector<12x1xf32> to vector<12x12xf32>
    %30 = vector.broadcast %28 : vector<1x12xf32> to vector<12x12xf32>
    %31 = arith.addf %29, %30 : vector<12x12xf32>
    %cst_22 = arith.constant 2.000000e-01 : f32
    %32 = vector.broadcast %cst_22 : f32 to vector<12x12xf32>
    %33 = arith.mulf %32, %31 : vector<12x12xf32>
    %34 = arith.maximumf %31, %33 : vector<12x12xf32>
    %35 = vector.broadcast %10 : f32 to vector<12x12xf32>
    %36 = arith.mulf %35, %34 : vector<12x12xf32>
    %37 = vector.extract_strided_slice %8 {offsets = [0, 1], sizes = [12, 1], strides = [1, 1]} : vector<12x10xf32> to vector<12x1xf32>
    %38 = vector.extract_strided_slice %9 {offsets = [1, 0], sizes = [1, 12], strides = [1, 1]} : vector<10x12xf32> to vector<1x12xf32>
    %39 = vector.broadcast %37 : vector<12x1xf32> to vector<12x12xf32>
    %40 = vector.broadcast %38 : vector<1x12xf32> to vector<12x12xf32>
    %41 = arith.addf %39, %40 : vector<12x12xf32>
    %cst_23 = arith.constant 2.000000e-01 : f32
    %42 = vector.broadcast %cst_23 : f32 to vector<12x12xf32>
    %43 = arith.mulf %42, %41 : vector<12x12xf32>
    %44 = arith.maximumf %41, %43 : vector<12x12xf32>
    %45 = vector.broadcast %11 : f32 to vector<12x12xf32>
    %46 = arith.mulf %45, %44 : vector<12x12xf32>
    %47 = vector.extract_strided_slice %8 {offsets = [0, 2], sizes = [12, 1], strides = [1, 1]} : vector<12x10xf32> to vector<12x1xf32>
    %48 = vector.extract_strided_slice %9 {offsets = [2, 0], sizes = [1, 12], strides = [1, 1]} : vector<10x12xf32> to vector<1x12xf32>
    %49 = vector.broadcast %47 : vector<12x1xf32> to vector<12x12xf32>
    %50 = vector.broadcast %48 : vector<1x12xf32> to vector<12x12xf32>
    %51 = arith.addf %49, %50 : vector<12x12xf32>
    %cst_24 = arith.constant 2.000000e-01 : f32
    %52 = vector.broadcast %cst_24 : f32 to vector<12x12xf32>
    %53 = arith.mulf %52, %51 : vector<12x12xf32>
    %54 = arith.maximumf %51, %53 : vector<12x12xf32>
    %55 = vector.broadcast %12 : f32 to vector<12x12xf32>
    %56 = arith.mulf %55, %54 : vector<12x12xf32>
    %57 = vector.extract_strided_slice %8 {offsets = [0, 3], sizes = [12, 1], strides = [1, 1]} : vector<12x10xf32> to vector<12x1xf32>
    %58 = vector.extract_strided_slice %9 {offsets = [3, 0], sizes = [1, 12], strides = [1, 1]} : vector<10x12xf32> to vector<1x12xf32>
    %59 = vector.broadcast %57 : vector<12x1xf32> to vector<12x12xf32>
    %60 = vector.broadcast %58 : vector<1x12xf32> to vector<12x12xf32>
    %61 = arith.addf %59, %60 : vector<12x12xf32>
    %cst_25 = arith.constant 2.000000e-01 : f32
    %62 = vector.broadcast %cst_25 : f32 to vector<12x12xf32>
    %63 = arith.mulf %62, %61 : vector<12x12xf32>
    %64 = arith.maximumf %61, %63 : vector<12x12xf32>
    %65 = vector.broadcast %13 : f32 to vector<12x12xf32>
    %66 = arith.mulf %65, %64 : vector<12x12xf32>
    %67 = vector.extract_strided_slice %8 {offsets = [0, 4], sizes = [12, 1], strides = [1, 1]} : vector<12x10xf32> to vector<12x1xf32>
    %68 = vector.extract_strided_slice %9 {offsets = [4, 0], sizes = [1, 12], strides = [1, 1]} : vector<10x12xf32> to vector<1x12xf32>
    %69 = vector.broadcast %67 : vector<12x1xf32> to vector<12x12xf32>
    %70 = vector.broadcast %68 : vector<1x12xf32> to vector<12x12xf32>
    %71 = arith.addf %69, %70 : vector<12x12xf32>
    %cst_26 = arith.constant 2.000000e-01 : f32
    %72 = vector.broadcast %cst_26 : f32 to vector<12x12xf32>
    %73 = arith.mulf %72, %71 : vector<12x12xf32>
    %74 = arith.maximumf %71, %73 : vector<12x12xf32>
    %75 = vector.broadcast %14 : f32 to vector<12x12xf32>
    %76 = arith.mulf %75, %74 : vector<12x12xf32>
    %77 = arith.addf %36, %76 : vector<12x12xf32>
    %78 = vector.extract_strided_slice %8 {offsets = [0, 5], sizes = [12, 1], strides = [1, 1]} : vector<12x10xf32> to vector<12x1xf32>
    %79 = vector.extract_strided_slice %9 {offsets = [5, 0], sizes = [1, 12], strides = [1, 1]} : vector<10x12xf32> to vector<1x12xf32>
    %80 = vector.broadcast %78 : vector<12x1xf32> to vector<12x12xf32>
    %81 = vector.broadcast %79 : vector<1x12xf32> to vector<12x12xf32>
    %82 = arith.addf %80, %81 : vector<12x12xf32>
    %cst_27 = arith.constant 2.000000e-01 : f32
    %83 = vector.broadcast %cst_27 : f32 to vector<12x12xf32>
    %84 = arith.mulf %83, %82 : vector<12x12xf32>
    %85 = arith.maximumf %82, %84 : vector<12x12xf32>
    %86 = vector.broadcast %15 : f32 to vector<12x12xf32>
    %87 = arith.mulf %86, %85 : vector<12x12xf32>
    %88 = arith.addf %46, %87 : vector<12x12xf32>
    %89 = vector.extract_strided_slice %8 {offsets = [0, 6], sizes = [12, 1], strides = [1, 1]} : vector<12x10xf32> to vector<12x1xf32>
    %90 = vector.extract_strided_slice %9 {offsets = [6, 0], sizes = [1, 12], strides = [1, 1]} : vector<10x12xf32> to vector<1x12xf32>
    %91 = vector.broadcast %89 : vector<12x1xf32> to vector<12x12xf32>
    %92 = vector.broadcast %90 : vector<1x12xf32> to vector<12x12xf32>
    %93 = arith.addf %91, %92 : vector<12x12xf32>
    %cst_28 = arith.constant 2.000000e-01 : f32
    %94 = vector.broadcast %cst_28 : f32 to vector<12x12xf32>
    %95 = arith.mulf %94, %93 : vector<12x12xf32>
    %96 = arith.maximumf %93, %95 : vector<12x12xf32>
    %97 = vector.broadcast %16 : f32 to vector<12x12xf32>
    %98 = arith.mulf %97, %96 : vector<12x12xf32>
    %99 = arith.addf %56, %98 : vector<12x12xf32>
    %100 = vector.extract_strided_slice %8 {offsets = [0, 7], sizes = [12, 1], strides = [1, 1]} : vector<12x10xf32> to vector<12x1xf32>
    %101 = vector.extract_strided_slice %9 {offsets = [7, 0], sizes = [1, 12], strides = [1, 1]} : vector<10x12xf32> to vector<1x12xf32>
    %102 = vector.broadcast %100 : vector<12x1xf32> to vector<12x12xf32>
    %103 = vector.broadcast %101 : vector<1x12xf32> to vector<12x12xf32>
    %104 = arith.addf %102, %103 : vector<12x12xf32>
    %cst_29 = arith.constant 2.000000e-01 : f32
    %105 = vector.broadcast %cst_29 : f32 to vector<12x12xf32>
    %106 = arith.mulf %105, %104 : vector<12x12xf32>
    %107 = arith.maximumf %104, %106 : vector<12x12xf32>
    %108 = vector.broadcast %17 : f32 to vector<12x12xf32>
    %109 = arith.mulf %108, %107 : vector<12x12xf32>
    %110 = arith.addf %66, %109 : vector<12x12xf32>
    %111 = vector.extract_strided_slice %8 {offsets = [0, 8], sizes = [12, 1], strides = [1, 1]} : vector<12x10xf32> to vector<12x1xf32>
    %112 = vector.extract_strided_slice %9 {offsets = [8, 0], sizes = [1, 12], strides = [1, 1]} : vector<10x12xf32> to vector<1x12xf32>
    %113 = vector.broadcast %111 : vector<12x1xf32> to vector<12x12xf32>
    %114 = vector.broadcast %112 : vector<1x12xf32> to vector<12x12xf32>
    %115 = arith.addf %113, %114 : vector<12x12xf32>
    %cst_30 = arith.constant 2.000000e-01 : f32
    %116 = vector.broadcast %cst_30 : f32 to vector<12x12xf32>
    %117 = arith.mulf %116, %115 : vector<12x12xf32>
    %118 = arith.maximumf %115, %117 : vector<12x12xf32>
    %119 = vector.broadcast %18 : f32 to vector<12x12xf32>
    %120 = arith.mulf %119, %118 : vector<12x12xf32>
    %121 = arith.addf %77, %120 : vector<12x12xf32>
    %122 = vector.extract_strided_slice %8 {offsets = [0, 9], sizes = [12, 1], strides = [1, 1]} : vector<12x10xf32> to vector<12x1xf32>
    %123 = vector.extract_strided_slice %9 {offsets = [9, 0], sizes = [1, 12], strides = [1, 1]} : vector<10x12xf32> to vector<1x12xf32>
    %124 = vector.broadcast %122 : vector<12x1xf32> to vector<12x12xf32>
    %125 = vector.broadcast %123 : vector<1x12xf32> to vector<12x12xf32>
    %126 = arith.addf %124, %125 : vector<12x12xf32>
    %cst_31 = arith.constant 2.000000e-01 : f32
    %127 = vector.broadcast %cst_31 : f32 to vector<12x12xf32>
    %128 = arith.mulf %127, %126 : vector<12x12xf32>
    %129 = arith.maximumf %126, %128 : vector<12x12xf32>
    %130 = vector.broadcast %19 : f32 to vector<12x12xf32>
    %131 = arith.mulf %130, %129 : vector<12x12xf32>
    %132 = arith.addf %88, %131 : vector<12x12xf32>
    %133 = arith.addf %121, %132 : vector<12x12xf32>
    %134 = arith.addf %99, %110 : vector<12x12xf32>
    %135 = arith.addf %133, %134 : vector<12x12xf32>
    %136 = arith.addf %26, %135 : vector<12x12xf32>
    %cst_32 = arith.constant dense<0xFF800000> : vector<12xf32>
    %137 = vector.multi_reduction <maximumf>, %136, %cst_32 [1] : vector<12x12xf32> to vector<12xf32>
    %138 = vector.shape_cast %137 : vector<12xf32> to vector<12x1xf32>
    %139 = vector.broadcast %138 : vector<12x1xf32> to vector<12x12xf32>
    %140 = arith.subf %136, %139 : vector<12x12xf32>
    %141 = math.exp %140 : vector<12x12xf32>
    %cst_33 = arith.constant dense<0.000000e+00> : vector<12xf32>
    %142 = vector.multi_reduction <add>, %141, %cst_33 [1] : vector<12x12xf32> to vector<12xf32>
    %143 = vector.shape_cast %142 : vector<12xf32> to vector<12x1xf32>
    %144 = tpu.reciprocal %143 {approx = true} : vector<12x1xf32> -> vector<12x1xf32>
    %145 = vector.broadcast %144 : vector<12x1xf32> to vector<12x12xf32>
    %146 = arith.mulf %141, %145 : vector<12x12xf32>
    %cst_34 = arith.constant dense<0.000000e+00> : vector<12x10xf32>
    %147 = tpu.matmul %146, %7, %cst_34 {dimension_numbers = #tpu.dot_dimension_numbers<[1], [0], [0], [1], [0, 0, 1, 1], [], []>} : vector<12x12xf32>, vector<12x10xf32>, vector<12x10xf32> -> vector<12x10xf32>
    %c0_35 = arith.constant 0 : index
    %c0_36 = arith.constant 0 : index
    %148 = vector.load %arg6[%c0_35, %c0_36] : memref<1x10xf32, #tpu.memory_space<vmem>>, vector<1x10xf32>
    %149 = vector.broadcast %148 : vector<1x10xf32> to vector<12x10xf32>
    %150 = arith.addf %147, %149 : vector<12x10xf32>
    %cst_37 = arith.constant 0.000000e+00 : f32
    %151 = vector.broadcast %cst_37 : f32 to vector<12x10xf32>
    %152 = arith.maximumf %150, %151 : vector<12x10xf32>
    %c0_38 = arith.constant 0 : index
    %c0_39 = arith.constant 0 : index
    %c0_40 = arith.constant 0 : index
    %153 = vector.load %arg7[%c0_38, %c0_39, %c0_40] : memref<1x2x12xf32, #tpu.memory_space<vmem>>, vector<1x2x12xf32>
    %154 = vector.shape_cast %153 : vector<1x2x12xf32> to vector<2x12xf32>
    %cst_41 = arith.constant dense<0.000000e+00> : vector<2x10xf32>
    %155 = tpu.matmul %154, %152, %cst_41 {dimension_numbers = #tpu.dot_dimension_numbers<[1], [0], [0], [1], [0, 0, 1, 1], [], []>} : vector<2x12xf32>, vector<12x10xf32>, vector<2x10xf32> -> vector<2x10xf32>
    %c0_42 = arith.constant 0 : index
    %c0_43 = arith.constant 0 : index
    %156 = vector.load %arg8[%c0_42, %c0_43] : memref<10x4xf32, #tpu.memory_space<vmem>>, vector<10x4xf32>
    %cst_44 = arith.constant dense<0.000000e+00> : vector<2x4xf32>
    %157 = tpu.matmul %155, %156, %cst_44 {dimension_numbers = #tpu.dot_dimension_numbers<[1], [0], [0], [1], [0, 0, 1, 1], [], []>} : vector<2x10xf32>, vector<10x4xf32>, vector<2x4xf32> -> vector<2x4xf32>
    %c0_45 = arith.constant 0 : index
    %c0_46 = arith.constant 0 : index
    %158 = vector.load %arg9[%c0_45, %c0_46] : memref<1x4xf32, #tpu.memory_space<vmem>>, vector<1x4xf32>
    %159 = vector.broadcast %158 : vector<1x4xf32> to vector<2x4xf32>
    %160 = arith.addf %157, %159 : vector<2x4xf32>
    %cst_47 = arith.constant dense<0xFF800000> : vector<2xf32>
    %161 = vector.multi_reduction <maximumf>, %160, %cst_47 [1] : vector<2x4xf32> to vector<2xf32>
    %162 = vector.shape_cast %161 : vector<2xf32> to vector<2x1xf32>
    %163 = vector.broadcast %162 : vector<2x1xf32> to vector<2x4xf32>
    %164 = arith.subf %160, %163 : vector<2x4xf32>
    %165 = math.exp %164 : vector<2x4xf32>
    %cst_48 = arith.constant dense<0.000000e+00> : vector<2xf32>
    %166 = vector.multi_reduction <add>, %165, %cst_48 [1] : vector<2x4xf32> to vector<2xf32>
    %167 = vector.shape_cast %166 : vector<2xf32> to vector<2x1xf32>
    %168 = vector.broadcast %167 : vector<2x1xf32> to vector<2x4xf32>
    %169 = arith.divf %165, %168 : vector<2x4xf32>
    %c0_49 = arith.constant 0 : index
    %c0_50 = arith.constant 0 : index
    %c0_51 = arith.constant 0 : index
    %170 = vector.load %arg10[%c0_49, %c0_50, %c0_51] : memref<1x2x4xf32, #tpu.memory_space<vmem>>, vector<1x2x4xf32>
    %171 = vector.shape_cast %170 : vector<1x2x4xf32> to vector<2x4xf32>
    %172 = vector.shape_cast %169 : vector<2x4xf32> to vector<1x2x4xf32>
    tpu.vector_store %arg10[%c0_49, %c0_50, %c0_51], %172 {strides = array<i32>} : memref<1x2x4xf32, #tpu.memory_space<vmem>>, vector<1x2x4xf32>,
    %c0_52 = arith.constant 0 : index
    %c0_53 = arith.constant 0 : index
    %c0_54 = arith.constant 0 : index
    %173 = vector.load %arg11[%c0_52, %c0_53, %c0_54] : memref<1x2x10xf32, #tpu.memory_space<vmem>>, vector<1x2x10xf32>
    %174 = vector.shape_cast %173 : vector<1x2x10xf32> to vector<2x10xf32>
    %175 = vector.shape_cast %155 : vector<2x10xf32> to vector<1x2x10xf32>
    tpu.vector_store %arg11[%c0_52, %c0_53, %c0_54], %175 {strides = array<i32>} : memref<1x2x10xf32, #tpu.memory_space<vmem>>, vector<1x2x10xf32>,
    return
  }
  func.func @transform_0(%arg0: i32) -> (i32, i32, i32) {
    %c0_i32 = arith.constant 0 : i32
    %c0_i32_0 = arith.constant 0 : i32
    %c0_i32_1 = arith.constant 0 : i32
    return %arg0, %c0_i32, %c0_i32_0 : i32, i32, i32
  }
  func.func @transform_1(%arg0: i32) -> (i32, i32) {
    %c0_i32 = arith.constant 0 : i32
    %c0_i32_0 = arith.constant 0 : i32
    %c0_i32_1 = arith.constant 0 : i32
    return %c0_i32, %c0_i32_0 : i32, i32
  }
  func.func @transform_2(%arg0: i32) -> (i32, i32) {
    %c0_i32 = arith.constant 0 : i32
    %c0_i32_0 = arith.constant 0 : i32
    %c0_i32_1 = arith.constant 0 : i32
    return %c0_i32, %c0_i32_0 : i32, i32
  }
  func.func @transform_3(%arg0: i32) -> (i32, i32) {
    %c0_i32 = arith.constant 0 : i32
    %c0_i32_0 = arith.constant 0 : i32
    %c0_i32_1 = arith.constant 0 : i32
    return %c0_i32, %c0_i32_0 : i32, i32
  }
  func.func @transform_4(%arg0: i32) -> (i32, i32, i32) {
    %c0_i32 = arith.constant 0 : i32
    %c0_i32_0 = arith.constant 0 : i32
    %c0_i32_1 = arith.constant 0 : i32
    return %arg0, %c0_i32, %c0_i32_0 : i32, i32, i32
  }
  func.func @transform_5(%arg0: i32) -> (i32, i32) {
    %c0_i32 = arith.constant 0 : i32
    %c0_i32_0 = arith.constant 0 : i32
    %c0_i32_1 = arith.constant 0 : i32
    return %c0_i32, %c0_i32_0 : i32, i32
  }
  func.func @transform_6(%arg0: i32) -> (i32, i32, i32) {
    %c0_i32 = arith.constant 0 : i32
    %c0_i32_0 = arith.constant 0 : i32
    %c0_i32_1 = arith.constant 0 : i32
    return %arg0, %c0_i32, %c0_i32_0 : i32, i32, i32
  }
  func.func @transform_7(%arg0: i32) -> (i32, i32) {
    %c0_i32 = arith.constant 0 : i32
    %c0_i32_0 = arith.constant 0 : i32
    %c0_i32_1 = arith.constant 0 : i32
    return %c0_i32, %c0_i32_0 : i32, i32
  }
  func.func @transform_8(%arg0: i32) -> (i32, i32) {
    %c0_i32 = arith.constant 0 : i32
    %c0_i32_0 = arith.constant 0 : i32
    %c0_i32_1 = arith.constant 0 : i32
    return %c0_i32, %c0_i32_0 : i32, i32
  }
  func.func @transform_9(%arg0: i32) -> (i32, i32, i32) {
    %c0_i32 = arith.constant 0 : i32
    %c0_i32_0 = arith.constant 0 : i32
    %c0_i32_1 = arith.constant 0 : i32
    return %arg0, %c0_i32, %c0_i32_0 : i32, i32, i32
  }
  func.func @transform_10(%arg0: i32) -> (i32, i32, i32) {
    %c0_i32 = arith.constant 0 : i32
    %c0_i32_0 = arith.constant 0 : i32
    %c0_i32_1 = arith.constant 0 : i32
    return %arg0, %c0_i32, %c0_i32_0 : i32, i32, i32
  }
}

</mosaic_0001>

<llo_original>
// kernel: tpu_custom_call.1
$region0: #{tpu_custom_call.1}
  #allocation0 [shape = 'u32[]', space=smem, size = 0x4, offset = 0x4, fixed_abs, tag = 'smem constant byte address 0x4 - core index']
  #allocation1 [shape = 'u32[144,128]{1,0:T(1,128)}', space=vmem, size = 0x12000, scoped, tag = 'internal scratch']
  %s0 = inlined_call_operand.vmem [shape: f32[4,12,16], index: 0, kind: input, shape index: {}]
  %s1 = inlined_call_operand.vmem [shape: f32[16,20], index: 1, kind: input, shape index: {}]
  %s2 = inlined_call_operand.vmem [shape: f32[1,20], index: 2, kind: input, shape index: {}]
  %s3 = inlined_call_operand.vmem [shape: f32[1,10], index: 3, kind: input, shape index: {}]
  %s4 = inlined_call_operand.vmem [shape: s8[4,12,12], index: 4, kind: input, shape index: {}]
  %s5 = inlined_call_operand.vmem [shape: f32[1,10], index: 5, kind: input, shape index: {}]
  %s6 = inlined_call_operand.vmem [shape: f32[4,2,12], index: 6, kind: input, shape index: {}]
  %s7 = inlined_call_operand.vmem [shape: f32[10,4], index: 7, kind: input, shape index: {}]
  %s8 = inlined_call_operand.vmem [shape: f32[1,4], index: 8, kind: input, shape index: {}]
  %s9 = inlined_call_operand.hbm [shape: f32[4,2,4], index: 9, kind: output, shape index: {0}]
  %s10 = inlined_call_operand.hbm [shape: f32[4,2,10], index: 10, kind: output, shape index: {1}]
  %11 = xla_tuple %s9, %s10
  %s12 = sld [smem:[#allocation0]]
  $region81: #{tpu_custom_call.1} parent=0
    _
  %s14 = ssub.s32 1, %s12
  %s15 = scalar_select 0, %s14, %s12
  $region1: #{tpu_custom_call.1} parent=0
    #allocation2 [shape = 'u8[512]{0}', space=smem, size = 0x200, scoped, tag = 'input window, operand 3, single buffered']
    #allocation3 [shape = 's32[2]{0}', space=sflag, size = 0x8, scoped, tag = 'scoped memory for tpu_custom_call.1']
    #allocation4 [shape = 's32[2]{0}', space=sflag, size = 0x8, scoped, tag = 'scoped memory for tpu_custom_call.1']
    #allocation5 [shape = 'u8[2048]{0}', space=vmem, size = 0x800, scoped, tag = 'output window, operand 0']
    #allocation6 [shape = 'u8[2048]{0}', space=vmem, size = 0x800, scoped, tag = 'output window, operand 1']
    #allocation7 [shape = 's32[2]{0}', space=sflag, size = 0x8, scoped, tag = 'scoped memory for tpu_custom_call.1']
    %16 = vsyncpa [#allocation4], 0
    %17 = vsyncpa [#allocation3], 0
    %s18 = scalar_lea.sflag [#allocation3], 1
    %19 = vsyncpa %s18, 0
    %20 = vsyncpa [#allocation7], 0
    %s21 = scalar_lea.sflag [#allocation7], 1
    %22 = vsyncpa %s21, 0
    loop: start=0, step=1, limit=6
    $region2: #{tpu_custom_call.1} parent=1 // loop_pre_header
      _
    $region3: #{tpu_custom_call.1} parent=1 // loop_header
      %s24 = sphi 0, %s28
      %p25 = scmp.ge.s32.totalorder %s24, 6
      %s34 = sphi 0, %s36
      %s37 = sphi 0, %s34
      %s38 = sphi 0, %s37
      %s54 = sphi 0, %s38
      %s58 = sphi 0, %s58
      %s60 = sphi 0, %s58
      %s61 = sphi 0, %s60
      %s75 = sphi 0, %s61
      %s79 = sphi 0, %s79
      %s81 = sphi 0, %s79
      %s82 = sphi 0, %s81
      %s96 = sphi 0, %s82
      %s100 = sphi 0, %s100
      %s102 = sphi 0, %s100
      %s103 = sphi 0, %s102
      %s117 = sphi 0, %s103
      %s123 = sphi 0, %s125
      %s126 = sphi 0, %s123
      %s127 = sphi 0, %s126
      %s143 = sphi 0, %s127
      %s147 = sphi 0, %s147
      %s149 = sphi 0, %s147
      %s150 = sphi 0, %s149
      %s164 = sphi 0, %s150
      %s170 = sphi 0, %s172
      %s173 = sphi 0, %s170
      %s174 = sphi 0, %s173
      %s190 = sphi 0, %s174
      %s194 = sphi 0, %s194
      %s196 = sphi 0, %s194
      %s197 = sphi 0, %s196
      %s211 = sphi 0, %s197
      %s215 = sphi 0, %s215
      %s217 = sphi 0, %s215
      %s218 = sphi 0, %s217
      %s232 = sphi 0, %s218
      %s238 = sphi 0, %s240
      %s241 = sphi 0, %s238
      %s242 = sphi 0, %s241
      %s258 = sphi 0, %s242
      %s264 = sphi 0, %s266
      %s267 = sphi 0, %s264
      %s268 = sphi 0, %s267
      %s284 = sphi 0, %s268
    $region4: #{tpu_custom_call.1} parent=1 // loop_header_branch
      %27 = sbr.rel (%p25) target = $region8
    $region5: #{tpu_custom_call.1} parent=1 // loop_body
      %s29 = ssub.s32 %s24, 1
      %s30 = ssub.s32 %s24, 2
      %s31 = sadd.s32 %s24, 1
      %s32 = ssub.s32 %s24, %s31
      %p33 = scmp.eq.s32.totalorder %s32, 0
      %s35 = sadd.s32 %s34, 1
      %s36 = scalar_select %p33, %s34, %s35
      %p39 = pneg %p33
      %p40 = scmp.eq.s32.totalorder %s24, 3
      %p41 = por %p39, %p40
      %p42 = scmp.ne.s32.totalorder %s34, %s37
      %p43 = scmp.eq.s32.totalorder %s24, 0
      %p44 = por %p42, %p43
      %p45 = scmp.ne.s32.totalorder %s34, %s37
      %p46 = scmp.eq.s32.totalorder %s29, 3
      %p47 = por %p45, %p46
      %p48 = scmp.ne.s32.totalorder %s37, %s38
      %p49 = scmp.eq.s32.totalorder %s29, 0
      %p50 = por %p48, %p49
      %p51 = scmp.ne.s32.totalorder %s37, %s38
      %p52 = scmp.eq.s32.totalorder %s30, 3
      %p53 = por %p51, %p52
      %p55 = scmp.ne.s32.totalorder %s38, %s54
      %p56 = scmp.eq.s32.totalorder %s30, 0
      %p57 = por %p55, %p56
      %s59 = sadd.s32 %s58, 1
      %p62 = scmp.eq.s32.totalorder %s24, 3
      %p63 = scmp.ne.s32.totalorder %s58, %s60
      %p64 = scmp.eq.s32.totalorder %s24, 0
      %p65 = por %p63, %p64
      %p66 = scmp.ne.s32.totalorder %s58, %s60
      %p67 = scmp.eq.s32.totalorder %s29, 3
      %p68 = por %p66, %p67
      %p69 = scmp.ne.s32.totalorder %s60, %s61
      %p70 = scmp.eq.s32.totalorder %s29, 0
      %p71 = por %p69, %p70
      %p72 = scmp.ne.s32.totalorder %s60, %s61
      %p73 = scmp.eq.s32.totalorder %s30, 3
      %p74 = por %p72, %p73
      %p76 = scmp.ne.s32.totalorder %s61, %s75
      %p77 = scmp.eq.s32.totalorder %s30, 0
      %p78 = por %p76, %p77
      %s80 = sadd.s32 %s79, 1
      %p83 = scmp.eq.s32.totalorder %s24, 3
      %p84 = scmp.ne.s32.totalorder %s79, %s81
      %p85 = scmp.eq.s32.totalorder %s24, 0
      %p86 = por %p84, %p85
      %p87 = scmp.ne.s32.totalorder %s79, %s81
      %p88 = scmp.eq.s32.totalorder %s29, 3
      %p89 = por %p87, %p88
      %p90 = scmp.ne.s32.totalorder %s81, %s82
      %p91 = scmp.eq.s32.totalorder %s29, 0
      %p92 = por %p90, %p91
      %p93 = scmp.ne.s32.totalorder %s81, %s82
      %p94 = scmp.eq.s32.totalorder %s30, 3
      %p95 = por %p93, %p94
      %p97 = scmp.ne.s32.totalorder %s82, %s96
      %p98 = scmp.eq.s32.totalorder %s30, 0
      %p99 = por %p97, %p98
      %s101 = sadd.s32 %s100, 1
      %p104 = scmp.eq.s32.totalorder %s24, 3
      %p105 = scmp.ne.s32.totalorder %s100, %s102
      %p106 = scmp.eq.s32.totalorder %s24, 0
      %p107 = por %p105, %p106
      %p108 = scmp.ne.s32.totalorder %s100, %s102
      %p109 = scmp.eq.s32.totalorder %s29, 3
      %p110 = por %p108, %p109
      %p111 = scmp.ne.s32.totalorder %s102, %s103
      %p112 = scmp.eq.s32.totalorder %s29, 0
      %p113 = por %p111, %p112
      %p114 = scmp.ne.s32.totalorder %s102, %s103
      %p115 = scmp.eq.s32.totalorder %s30, 3
      %p116 = por %p114, %p115
      %p118 = scmp.ne.s32.totalorder %s103, %s117
      %p119 = scmp.eq.s32.totalorder %s30, 0
      %p120 = por %p118, %p119
      %s121 = ssub.s32 %s24, %s31
      %p122 = scmp.eq.s32.totalorder %s121, 0
      %s124 = sadd.s32 %s123, 1
      %s125 = scalar_select %p122, %s123, %s124
      %p128 = pneg %p122
      %p129 = scmp.eq.s32.totalorder %s24, 3
      %p130 = por %p128, %p129
      %p131 = scmp.ne.s32.totalorder %s123, %s126
      %p132 = scmp.eq.s32.totalorder %s24, 0
      %p133 = por %p131, %p132
      %p134 = scmp.ne.s32.totalorder %s123, %s126
      %p135 = scmp.eq.s32.totalorder %s29, 3
      %p136 = por %p134, %p135
      %p137 = scmp.ne.s32.totalorder %s126, %s127
      %p138 = scmp.eq.s32.totalorder %s29, 0
      %p139 = por %p137, %p138
      %p140 = scmp.ne.s32.totalorder %s126, %s127
      %p141 = scmp.eq.s32.totalorder %s30, 3
      %p142 = por %p140, %p141
      %p144 = scmp.ne.s32.totalorder %s127, %s143
      %p145 = scmp.eq.s32.totalorder %s30, 0
      %p146 = por %p144, %p145
      %s148 = sadd.s32 %s147, 1
      %p151 = scmp.eq.s32.totalorder %s24, 3
      %p152 = scmp.ne.s32.totalorder %s147, %s149
      %p153 = scmp.eq.s32.totalorder %s24, 0
      %p154 = por %p152, %p153
      %p155 = scmp.ne.s32.totalorder %s147, %s149
      %p156 = scmp.eq.s32.totalorder %s29, 3
      %p157 = por %p155, %p156
      %p158 = scmp.ne.s32.totalorder %s149, %s150
      %p159 = scmp.eq.s32.totalorder %s29, 0
      %p160 = por %p158, %p159
      %p161 = scmp.ne.s32.totalorder %s149, %s150
      %p162 = scmp.eq.s32.totalorder %s30, 3
      %p163 = por %p161, %p162
      %p165 = scmp.ne.s32.totalorder %s150, %s164
      %p166 = scmp.eq.s32.totalorder %s30, 0
      %p167 = por %p165, %p166
      %s168 = ssub.s32 %s24, %s31
      %p169 = scmp.eq.s32.totalorder %s168, 0
      %s171 = sadd.s32 %s170, 1
      %s172 = scalar_select %p169, %s170, %s171
      %p175 = pneg %p169
      %p176 = scmp.eq.s32.totalorder %s24, 3
      %p177 = por %p175, %p176
      %p178 = scmp.ne.s32.totalorder %s170, %s173
      %p179 = scmp.eq.s32.totalorder %s24, 0
      %p180 = por %p178, %p179
      %p181 = scmp.ne.s32.totalorder %s170, %s173
      %p182 = scmp.eq.s32.totalorder %s29, 3
      %p183 = por %p181, %p182
      %p184 = scmp.ne.s32.totalorder %s173, %s174
      %p185 = scmp.eq.s32.totalorder %s29, 0
      %p186 = por %p184, %p185
      %p187 = scmp.ne.s32.totalorder %s173, %s174
      %p188 = scmp.eq.s32.totalorder %s30, 3
      %p189 = por %p187, %p188
      %p191 = scmp.ne.s32.totalorder %s174, %s190
      %p192 = scmp.eq.s32.totalorder %s30, 0
      %p193 = por %p191, %p192
      %s195 = sadd.s32 %s194, 1
      %p198 = scmp.eq.s32.totalorder %s24, 3
      %p199 = scmp.ne.s32.totalorder %s194, %s196
      %p200 = scmp.eq.s32.totalorder %s24, 0
      %p201 = por %p199, %p200
      %p202 = scmp.ne.s32.totalorder %s194, %s196
      %p203 = scmp.eq.s32.totalorder %s29, 3
      %p204 = por %p202, %p203
      %p205 = scmp.ne.s32.totalorder %s196, %s197
      %p206 = scmp.eq.s32.totalorder %s29, 0
      %p207 = por %p205, %p206
      %p208 = scmp.ne.s32.totalorder %s196, %s197
      %p209 = scmp.eq.s32.totalorder %s30, 3
      %p210 = por %p208, %p209
      %p212 = scmp.ne.s32.totalorder %s197, %s211
      %p213 = scmp.eq.s32.totalorder %s30, 0
      %p214 = por %p212, %p213
      %s216 = sadd.s32 %s215, 1
      %p219 = scmp.eq.s32.totalorder %s24, 3
      %p220 = scmp.ne.s32.totalorder %s215, %s217
      %p221 = scmp.eq.s32.totalorder %s24, 0
      %p222 = por %p220, %p221
      %p223 = scmp.ne.s32.totalorder %s215, %s217
      %p224 = scmp.eq.s32.totalorder %s29, 3
      %p225 = por %p223, %p224
      %p226 = scmp.ne.s32.totalorder %s217, %s218
      %p227 = scmp.eq.s32.totalorder %s29, 0
      %p228 = por %p226, %p227
      %p229 = scmp.ne.s32.totalorder %s217, %s218
      %p230 = scmp.eq.s32.totalorder %s30, 3
      %p231 = por %p229, %p230
      %p233 = scmp.ne.s32.totalorder %s218, %s232
      %p234 = scmp.eq.s32.totalorder %s30, 0
      %p235 = por %p233, %p234
      %s236 = ssub.s32 %s24, %s31
      %p237 = scmp.eq.s32.totalorder %s236, 0
      %s239 = sadd.s32 %s238, 1
      %s240 = scalar_select %p237, %s238, %s239
      %p243 = pneg %p237
      %p244 = scmp.eq.s32.totalorder %s24, 3
      %p245 = por %p243, %p244
      %p246 = scmp.ne.s32.totalorder %s238, %s241
      %p247 = scmp.eq.s32.totalorder %s24, 0
      %p248 = por %p246, %p247
      %p249 = scmp.ne.s32.totalorder %s238, %s241
      %p250 = scmp.eq.s32.totalorder %s29, 3
      %p251 = por %p249, %p250
      %p252 = scmp.ne.s32.totalorder %s241, %s242
      %p253 = scmp.eq.s32.totalorder %s29, 0
      %p254 = por %p252, %p253
      %p255 = scmp.ne.s32.totalorder %s241, %s242
      %p256 = scmp.eq.s32.totalorder %s30, 3
      %p257 = por %p255, %p256
      %p259 = scmp.ne.s32.totalorder %s242, %s258
      %p260 = scmp.eq.s32.totalorder %s30, 0
      %p261 = por %p259, %p260
      %s262 = ssub.s32 %s24, %s31
      %p263 = scmp.eq.s32.totalorder %s262, 0
      %s265 = sadd.s32 %s264, 1
      %s266 = scalar_select %p263, %s264, %s265
      %p269 = pneg %p263
      %p270 = scmp.eq.s32.totalorder %s24, 3
      %p271 = por %p269, %p270
      %p272 = scmp.ne.s32.totalorder %s264, %s267
      %p273 = scmp.eq.s32.totalorder %s24, 0
      %p274 = por %p272, %p273
      %p275 = scmp.ne.s32.totalorder %s264, %s267
      %p276 = scmp.eq.s32.totalorder %s29, 3
      %p277 = por %p275, %p276
      %p278 = scmp.ne.s32.totalorder %s267, %s268
      %p279 = scmp.eq.s32.totalorder %s29, 0
      %p280 = por %p278, %p279
      %p281 = scmp.ne.s32.totalorder %s267, %s268
      %p282 = scmp.eq.s32.totalorder %s30, 3
      %p283 = por %p281, %p282
      %p285 = scmp.ne.s32.totalorder %s268, %s284
      %p286 = scmp.eq.s32.totalorder %s30, 0
      %p287 = por %p285, %p286
      %p288 = scmp.le.s32.totalorder 1, %s24
      %p289 = scmp.lt.s32.totalorder %s24, 5
      %p290 = pnand %p288, %p289
      %p291 = pneg %p290
      // Predicated region
      $region9: #{tpu_custom_call.1} parent=5 // pred_check
        _
      $region10: #{tpu_custom_call.1} parent=5 // pred_check_branch
        %293 = sbr.rel (%p290) target = $region12
      $region11: #{tpu_custom_call.1} parent=5 // pred_region
        %s294 = ssub.s32 %s24, 1
        // Predicated region
        $region13: #{tpu_custom_call.1} parent=11 // pred_check
          %p295 = pneg %p71
        $region14: #{tpu_custom_call.1} parent=11 // pred_check_branch
          %297 = sbr.rel (%p295) target = $region16
        $region15: #{tpu_custom_call.1} parent=11 // pred_region
          _
        $region16: #{tpu_custom_call.1} parent=11 // pred_fallthru
          _
        // Predicated region
        $region17: #{tpu_custom_call.1} parent=11 // pred_check
          %p298 = pneg %p92
        $region18: #{tpu_custom_call.1} parent=11 // pred_check_branch
          %300 = sbr.rel (%p298) target = $region20
        $region19: #{tpu_custom_call.1} parent=11 // pred_region
          _
        $region20: #{tpu_custom_call.1} parent=11 // pred_fallthru
          _
        // Predicated region
        $region21: #{tpu_custom_call.1} parent=11 // pred_check
          %p301 = pneg %p113
        $region22: #{tpu_custom_call.1} parent=11 // pred_check_branch
          %303 = sbr.rel (%p301) target = $region24
        $region23: #{tpu_custom_call.1} parent=11 // pred_region
          %s305 = ssub.s32 16, 16
          %306 = vsyncadd [#allocation4], %s305
          %s308 = sshll.u32 %s3, 4
          %s309 = int_to_ptr.vmem [resolvable:$true] %s308
          %311 = dma.vmem_to_smem %s309, 16, [#allocation2], [#allocation4]
        $region24: #{tpu_custom_call.1} parent=11 // pred_fallthru
          _
        // Predicated region
        $region25: #{tpu_custom_call.1} parent=11 // pred_check
          %p312 = pneg %p160
        $region26: #{tpu_custom_call.1} parent=11 // pred_check_branch
          %314 = sbr.rel (%p312) target = $region28
        $region27: #{tpu_custom_call.1} parent=11 // pred_region
          _
        $region28: #{tpu_custom_call.1} parent=11 // pred_fallthru
          _
        // Predicated region
        $region29: #{tpu_custom_call.1} parent=11 // pred_check
          %p315 = pneg %p207
        $region30: #{tpu_custom_call.1} parent=11 // pred_check_branch
          %317 = sbr.rel (%p315) target = $region32
        $region31: #{tpu_custom_call.1} parent=11 // pred_region
          _
        $region32: #{tpu_custom_call.1} parent=11 // pred_fallthru
          _
        // Predicated region
        $region33: #{tpu_custom_call.1} parent=11 // pred_check
          %p318 = pneg %p228
        $region34: #{tpu_custom_call.1} parent=11 // pred_check_branch
          %320 = sbr.rel (%p318) target = $region36
        $region35: #{tpu_custom_call.1} parent=11 // pred_region
          _
        $region36: #{tpu_custom_call.1} parent=11 // pred_fallthru
          _
      $region12: #{tpu_custom_call.1} parent=5 // pred_fallthru
        _
      %p321 = scmp.lt.s32.totalorder %s24, 4
      // Predicated region
      $region37: #{tpu_custom_call.1} parent=5 // pred_check
        %p322 = pneg %p321
      $region38: #{tpu_custom_call.1} parent=5 // pred_check_branch
        %324 = sbr.rel (%p322) target = $region40
      $region39: #{tpu_custom_call.1} parent=5 // pred_region
        // Predicated region
        $region41: #{tpu_custom_call.1} parent=39 // pred_check
          %p325 = pneg %p44
        $region42: #{tpu_custom_call.1} parent=39 // pred_check_branch
          %327 = sbr.rel (%p325) target = $region44
        $region43: #{tpu_custom_call.1} parent=39 // pred_region
          %p328 = scmp.lt.s32.totalorder %s24, 3
          %s329 = scalar_select %p328, %s24, 3
          %s330 = smul.addr %s329, 2
          %s331 = smul.addr %s330, 8
          %s332 = scalar_lea.vmem %s0, %s331
        $region44: #{tpu_custom_call.1} parent=39 // pred_fallthru
          _
        // Predicated region
        $region45: #{tpu_custom_call.1} parent=39 // pred_check
          %p333 = pneg %p133
        $region46: #{tpu_custom_call.1} parent=39 // pred_check_branch
          %335 = sbr.rel (%p333) target = $region48
        $region47: #{tpu_custom_call.1} parent=39 // pred_region
          %p336 = scmp.lt.s32.totalorder %s24, 3
          %s337 = scalar_select %p336, %s24, 3
          %s338 = smul.addr %s337, 2
          %s339 = smul.addr %s338, 2
          %s340 = scalar_lea.vmem %s4, %s339
        $region48: #{tpu_custom_call.1} parent=39 // pred_fallthru
          _
        // Predicated region
        $region49: #{tpu_custom_call.1} parent=39 // pred_check
          %p341 = pneg %p180
        $region50: #{tpu_custom_call.1} parent=39 // pred_check_branch
          %343 = sbr.rel (%p341) target = $region52
        $region51: #{tpu_custom_call.1} parent=39 // pred_region
          %p344 = scmp.lt.s32.totalorder %s24, 3
          %s345 = scalar_select %p344, %s24, 3
          %s346 = smul.addr %s345, 2
          %s347 = scalar_lea.vmem %s6, %s346
        $region52: #{tpu_custom_call.1} parent=39 // pred_fallthru
          _
      $region40: #{tpu_custom_call.1} parent=5 // pred_fallthru
        _
      %p348 = scmp.le.s32.totalorder 1, %s24
      %p349 = scmp.lt.s32.totalorder %s24, 5
      %p350 = pnand %p348, %p349
      %p351 = pneg %p350
      // Predicated region
      $region53: #{tpu_custom_call.1} parent=5 // pred_check
        _
      $region54: #{tpu_custom_call.1} parent=5 // pred_check_branch
        %353 = sbr.rel (%p350) target = $region56
      $region55: #{tpu_custom_call.1} parent=5 // pred_region
        %s354 = ssub.s32 %s24, 1
        // Predicated region
        $region57: #{tpu_custom_call.1} parent=55 // pred_check
          %p355 = pneg %p113
        $region58: #{tpu_custom_call.1} parent=55 // pred_check_branch
          %357 = sbr.rel (%p355) target = $region60
        $region59: #{tpu_custom_call.1} parent=55 // pred_region
          %358 = dma.done [#allocation4], 16
        $region60: #{tpu_custom_call.1} parent=55 // pred_fallthru
          _
        %359 = sfence
        %p360 = scmp.lt.s32.totalorder %s29, 3
        %s361 = scalar_select %p360, %s29, 3
        %s362 = smul.addr %s361, 2
        %s363 = smul.addr %s362, 8
        %s364 = scalar_lea.vmem %s0, %s363
        %p365 = pneg %p50
        %p366 = pneg %p47
        %p367 = pneg %p71
        %p368 = pneg %p68
        %p369 = pneg %p92
        %p370 = pneg %p89
        %p371 = pneg %p113
        %p372 = pneg %p110
        %p373 = scmp.lt.s32.totalorder %s29, 3
        %s374 = scalar_select %p373, %s29, 3
        %s375 = smul.addr %s374, 2
        %s376 = smul.addr %s375, 2
        %s377 = scalar_lea.vmem %s4, %s376
        %p378 = pneg %p139
        %p379 = pneg %p136
        %p380 = pneg %p160
        %p381 = pneg %p157
        %p382 = scmp.lt.s32.totalorder %s29, 3
        %s383 = scalar_select %p382, %s29, 3
        %s384 = smul.addr %s383, 2
        %s385 = scalar_lea.vmem %s6, %s384
        %p386 = pneg %p186
        %p387 = pneg %p183
        %p388 = pneg %p207
        %p389 = pneg %p204
        %p390 = pneg %p228
        %p391 = pneg %p225
        %p392 = pneg %p254
        %p393 = pneg %p251
        %s394 = sand.u32 %s241, 1
        %s395 = scalar_lea.sflag [#allocation3], %s394
        %s396 = sand.u32 %s241, 1
        %s397 = smul.addr %s396, 2
        %s398 = scalar_lea.vmem [#allocation5], %s397
        %p399 = pneg %p280
        %p400 = pneg %p277
        %s401 = sand.u32 %s267, 1
        %s402 = scalar_lea.sflag [#allocation7], %s401
        %s403 = sand.u32 %s267, 1
        %s404 = smul.addr %s403, 2
        %s405 = scalar_lea.vmem [#allocation6], %s404
        %p406 = scmp.lt.s32.totalorder %s29, 3
        %s407 = scalar_select %p406, %s29, 3
        %s408 = smul.addr %s407, 2
        %s409 = smul.addr %s408, 8
        %s410 = scalar_lea.vmem %s0, %s409
        %p411 = scmp.lt.s32.totalorder %s29, 3
        %s412 = scalar_select %p411, %s29, 3
        %s413 = smul.addr %s412, 2
        %s414 = smul.addr %s413, 2
        %s415 = scalar_lea.vmem %s4, %s414
        %p416 = scmp.lt.s32.totalorder %s29, 3
        %s417 = scalar_select %p416, %s29, 3
        %s418 = smul.addr %s417, 2
        %s419 = scalar_lea.vmem %s6, %s418
        %v420 = vld [vmem:[%s410] sm:$0xff]
        %v421 = vld [vmem:[%s410 + $0x8] sm:$0xf]
        %v422 = vld [vmem:[%s1] sm:$0xff]
        %v423 = vld [vmem:[%s1 + $0x8] sm:$0xff]
        %v424 = vld [vmem:[%s2] sm:$0x1]
        %v426 = vlaneseq
        %v427 = vshrl.u32 %v426, 7
        %v428 = vsub.s32 0, %v427
        %v429 = vrot.slane %v424, %v428
        %vm431 = vcmask 130048
        %v433 = vsel %vm431, %v420, 0
        %v436 = vsel %vm431, %v421, 0
        %438 = vmatprep.subr.mxu0 0.0
        %439 = vmatpush1.msra.mxu0 %v422
        %440 = vmatprep.subr.mxu0 0.0
        %441 = vmatpush1.msra.mxu0 %v423
        %442 = vmatprep.subr.mxu0 0.0
        %443 = vmatpush1.msra.mxu0 0.0
        %444 = vmatprep.subr.mxu0 0.0
        %445 = vmatpush1.msra.mxu0 0.0
        %446 = vmatprep.subr.mxu0 0.0
        %447 = vmatpush1.msra.mxu0 0.0
        %448 = vmatprep.subr.mxu0 0.0
        %449 = vmatpush1.msra.mxu0 0.0
        %450 = vmatprep.subr.mxu0 0.0
        %451 = vmatpush1.msra.mxu0 0.0
        %452 = vmatprep.subr.mxu0 0.0
        %453 = vmatpush1.msra.mxu0 0.0
        %454 = vmatprep.subr.mxu0 0.0
        %455 = vmatpush1.msra.mxu0 0.0
        %456 = vmatprep.subr.mxu0 0.0
        %457 = vmatpush1.msra.mxu0 0.0
        %458 = vmatprep.subr.mxu0 0.0
        %459 = vmatpush1.msra.mxu0 0.0
        %460 = vmatprep.subr.mxu0 0.0
        %461 = vmatpush1.msra.mxu0 0.0
        %462 = vmatprep.subr.mxu0 0.0
        %463 = vmatpush1.msra.mxu0 0.0
        %464 = vmatprep.subr.mxu0 0.0
        %465 = vmatpush1.msra.mxu0 0.0
        %466 = vmatprep.subr.mxu0 0.0
        %467 = vmatpush1.msra.mxu0 0.0
        %468 = vmatprep.subr.mxu0 0.0
        %469 = vmatpush1.msra.mxu0 0.0
        %470 = vmatprep.subr.mxu0 0.0
        %471 = vmatpush1.msra.mxu0 0.0
        %472 = vmatprep.subr.mxu0 0.0
        %473 = vmatpush1.msra.mxu0 0.0
        %474 = vmatprep.subr.mxu0 0.0
        %475 = vmatpush1.msra.mxu0 0.0
        %476 = vmatprep.subr.mxu0 0.0
        %477 = vmatpush1.msra.mxu0 0.0
        %478 = vmatprep.subr.mxu0 0.0
        %479 = vmatpush1.msra.mxu0 0.0
        %480 = vmatprep.subr.mxu0 0.0
        %481 = vmatpush1.msra.mxu0 0.0
        %482 = vmatprep.subr.mxu0 0.0
        %483 = vmatpush1.msra.mxu0 0.0
        %484 = vmatprep.subr.mxu0 0.0
        %485 = vmatpush1.msra.mxu0 0.0
        %486 = vmatprep.subr.mxu0 0.0
        %487 = vmatpush1.msra.mxu0 0.0
        %488 = vmatprep.subr.mxu0 0.0
        %489 = vmatpush1.msra.mxu0 0.0
        %490 = vmatprep.subr.mxu0 0.0
        %491 = vmatpush1.msra.mxu0 0.0
        %492 = vmatprep.subr.mxu0 0.0
        %493 = vmatpush1.msra.mxu0 0.0
        %494 = vmatprep.subr.mxu0 0.0
        %495 = vmatpush1.msra.mxu0 0.0
        %496 = vmatprep.subr.mxu0 0.0
        %497 = vmatpush1.msra.mxu0 0.0
        %498 = vmatprep.subr.mxu0 0.0
        %499 = vmatpush1.msra.mxu0 0.0
        %500 = vmatprep.subr.mxu0 0.0
        %501 = vmatpush1.msra.mxu0 0.0
        %502 = vmatprep.mubr.f32.mxu0 0.0
        %503 = vmatmul.mubr.f32.gmra.mrb[0].mxu0 %v433
        %v504 = vpop.f32.mrb[0].mxu0
        %v505 = vadd.f32 %v429, %v504
        %v506 = vpop.f32.mrb[0].mxu0
        %507 = vmatprep.mubr.f32.mxu0 0.0
        %508 = vmatmul.mubr.f32.gmra.mrb[0].mxu0 %v436
        %v509 = vpop.f32.mrb[0].mxu0
        %v510 = vadd.f32 %v429, %v509
        %v511 = vpop.f32.mrb[0].mxu0
        %512 = vdwg.mxu0
        %513 = vxpose.xlu0.b32.start [1/16] %v505, 128
        %514 = vxpose.xlu0.b32.cont [2/16] %v510, 128
        %515 = vxpose.xlu0.b32.cont [3/16] 0.0, 128
        %516 = vxpose.xlu0.b32.cont [4/16] 0.0, 128
        %517 = vxpose.xlu0.b32.cont [5/16] 0.0, 128
        %518 = vxpose.xlu0.b32.cont [6/16] 0.0, 128
        %519 = vxpose.xlu0.b32.cont [7/16] 0.0, 128
        %520 = vxpose.xlu0.b32.cont [8/16] 0.0, 128
        %521 = vxpose.xlu0.b32.cont [9/16] 0.0, 128
        %522 = vxpose.xlu0.b32.cont [10/16] 0.0, 128
        %523 = vxpose.xlu0.b32.cont [11/16] 0.0, 128
        %524 = vxpose.xlu0.b32.cont [12/16] 0.0, 128
        %525 = vxpose.xlu0.b32.cont [13/16] 0.0, 128
        %526 = vxpose.xlu0.b32.cont [14/16] 0.0, 128
        %527 = vxpose.xlu0.b32.cont [15/16] 0.0, 128
        %528 = vxpose.xlu0.b32.end [16/16] 0.0, 128
        %v529 = vpop.trf.xlu0
        %v530 = vpop.trf.xlu0
        %v531 = vpop.trf.xlu0
        %v532 = vpop.trf.xlu0
        %v533 = vpop.trf.xlu0
        %v534 = vpop.trf.xlu0
        %v535 = vpop.trf.xlu0
        %v536 = vpop.trf.xlu0
        %v537 = vpop.trf.xlu0
        %v538 = vpop.trf.xlu0
        %v539 = vpop.trf.xlu0
        %v540 = vpop.trf.xlu0
        %v541 = vpop.trf.xlu0
        %v542 = vpop.trf.xlu0
        %v543 = vpop.trf.xlu0
        %v544 = vpop.trf.xlu0
        %s545 = sld [smem:[#allocation2]]
        %s546 = sld [smem:[#allocation2 + $0x1]]
        %s547 = sld [smem:[#allocation2 + $0x2]]
        %s548 = sld [smem:[#allocation2 + $0x3]]
        %s549 = sld [smem:[#allocation2 + $0x4]]
        %s550 = sld [smem:[#allocation2 + $0x5]]
        %s551 = sld [smem:[#allocation2 + $0x6]]
        %s552 = sld [smem:[#allocation2 + $0x7]]
        %s553 = sld [smem:[#allocation2 + $0x8]]
        %s554 = sld [smem:[#allocation2 + $0x9]]
        %v555 = vld [vmem:[%s415] sm:$0x3]
        %v556 = vld [vmem:[%s415 + $0x2] sm:$0x1]
        %v557 = vunpack.c.0.s8 %v555
        %v558 = vunpack.c.0.s8 %v556
        %v559 = vcvt.s32.f32 %v557
        %v560 = vcvt.s32.f32 %v558
        %v561 = vsub.f32 %v559, 1.0
        %v562 = vsub.f32 %v560, 1.0
        %v563 = vmul.f32 %v561, 1e+30
        %v564 = vmul.f32 %v562, 1e+30
        %566 = vset.pattern.permute.xlu0 10
        %567 = vperm.xlu0 %566, %v505
        %v568 = vpop.permute.xlu0 %567
        %571 = vset.pattern.permute.xlu0 10
        %572 = vperm.xlu0 %571, %v510
        %v573 = vpop.permute.xlu0 %572
        %v575 = vlaneseq
        %v576 = vshrl.u32 %v575, 7
        %v577 = vsub.s32 0, %v576
        %v578 = vrot.slane %v529, %v577
        %v579 = vadd.f32 %v568, %v578
        %v580 = vadd.f32 %v573, %v578
        %v581 = vmul.f32 %v579, 0.2
        %v582 = vmul.f32 %v580, 0.2
        %v583 = vmax.f32 %v579, %v581
        %v584 = vmax.f32 %v580, %v582
        %v585 = vstv %s545
        %v586 = vmul.f32 %v585, %v583
        %v587 = vmul.f32 %v585, %v584
        %588 = vset.pattern.permute.xlu0 11
        %589 = vperm.xlu0 %588, %v505
        %v590 = vpop.permute.xlu0 %589
        %592 = vset.pattern.permute.xlu0 11
        %593 = vperm.xlu0 %592, %v510
        %v594 = vpop.permute.xlu0 %593
        %v596 = vlaneseq
        %v597 = vshrl.u32 %v596, 7
        %v598 = vsub.s32 1, %v597
        %v599 = vrot.slane %v529, %v598
        %v600 = vadd.f32 %v590, %v599
        %v601 = vadd.f32 %v594, %v599
        %v602 = vmul.f32 %v600, 0.2
        %v603 = vmul.f32 %v601, 0.2
        %v604 = vmax.f32 %v600, %v602
        %v605 = vmax.f32 %v601, %v603
        %v606 = vstv %s546
        %v607 = vmul.f32 %v606, %v604
        %v608 = vmul.f32 %v606, %v605
        %609 = vset.pattern.permute.xlu0 12
        %610 = vperm.xlu0 %609, %v505
        %v611 = vpop.permute.xlu0 %610
        %613 = vset.pattern.permute.xlu0 12
        %614 = vperm.xlu0 %613, %v510
        %v615 = vpop.permute.xlu0 %614
        %v617 = vlaneseq
        %v618 = vshrl.u32 %v617, 7
        %v619 = vsub.s32 2, %v618
        %v620 = vrot.slane %v529, %v619
        %v621 = vadd.f32 %v611, %v620
        %v622 = vadd.f32 %v615, %v620
        %v623 = vmul.f32 %v621, 0.2
        %v624 = vmul.f32 %v622, 0.2
        %v625 = vmax.f32 %v621, %v623
        %v626 = vmax.f32 %v622, %v624
        %v627 = vstv %s547
        %v628 = vmul.f32 %v627, %v625
        %v629 = vmul.f32 %v627, %v626
        %630 = vset.pattern.permute.xlu0 13
        %631 = vperm.xlu0 %630, %v505
        %v632 = vpop.permute.xlu0 %631
        %634 = vset.pattern.permute.xlu0 13
        %635 = vperm.xlu0 %634, %v510
        %v636 = vpop.permute.xlu0 %635
        %v638 = vlaneseq
        %v639 = vshrl.u32 %v638, 7
        %v640 = vsub.s32 3, %v639
        %v641 = vrot.slane %v529, %v640
        %v642 = vadd.f32 %v632, %v641
        %v643 = vadd.f32 %v636, %v641
        %v644 = vmul.f32 %v642, 0.2
        %v645 = vmul.f32 %v643, 0.2
        %v646 = vmax.f32 %v642, %v644
        %v647 = vmax.f32 %v643, %v645
        %v648 = vstv %s548
        %v649 = vmul.f32 %v648, %v646
        %v650 = vmul.f32 %v648, %v647
        %651 = vset.pattern.permute.xlu0 14
        %652 = vperm.xlu0 %651, %v505
        %v653 = vpop.permute.xlu0 %652
        %655 = vset.pattern.permute.xlu0 14
        %656 = vperm.xlu0 %655, %v510
        %v657 = vpop.permute.xlu0 %656
        %v659 = vlaneseq
        %v660 = vshrl.u32 %v659, 7
        %v661 = vsub.s32 4, %v660
        %v662 = vrot.slane %v529, %v661
        %v663 = vadd.f32 %v653, %v662
        %v664 = vadd.f32 %v657, %v662
        %v665 = vmul.f32 %v663, 0.2
        %v666 = vmul.f32 %v664, 0.2
        %v667 = vmax.f32 %v663, %v665
        %v668 = vmax.f32 %v664, %v666
        %v669 = vstv %s549
        %v670 = vmul.f32 %v669, %v667
        %v671 = vmul.f32 %v669, %v668
        %v672 = vadd.f32 %v586, %v670
        %v673 = vadd.f32 %v587, %v671
        %674 = vset.pattern.permute.xlu0 15
        %675 = vperm.xlu0 %674, %v505
        %v676 = vpop.permute.xlu0 %675
        %678 = vset.pattern.permute.xlu0 15
        %679 = vperm.xlu0 %678, %v510
        %v680 = vpop.permute.xlu0 %679
        %v682 = vlaneseq
        %v683 = vshrl.u32 %v682, 7
        %v684 = vsub.s32 5, %v683
        %v685 = vrot.slane %v529, %v684
        %v686 = vadd.f32 %v676, %v685
        %v687 = vadd.f32 %v680, %v685
        %v688 = vmul.f32 %v686, 0.2
        %v689 = vmul.f32 %v687, 0.2
        %v690 = vmax.f32 %v686, %v688
        %v691 = vmax.f32 %v687, %v689
        %v692 = vstv %s550
        %v693 = vmul.f32 %v692, %v690
        %v694 = vmul.f32 %v692, %v691
        %v695 = vadd.f32 %v607, %v693
        %v696 = vadd.f32 %v608, %v694
        %697 = vset.pattern.permute.xlu0 16
        %698 = vperm.xlu0 %697, %v505
        %v699 = vpop.permute.xlu0 %698
        %701 = vset.pattern.permute.xlu0 16
        %702 = vperm.xlu0 %701, %v510
        %v703 = vpop.permute.xlu0 %702
        %v705 = vlaneseq
        %v706 = vshrl.u32 %v705, 7
        %v707 = vsub.s32 6, %v706
        %v708 = vrot.slane %v529, %v707
        %v709 = vadd.f32 %v699, %v708
        %v710 = vadd.f32 %v703, %v708
        %v711 = vmul.f32 %v709, 0.2
        %v712 = vmul.f32 %v710, 0.2
        %v713 = vmax.f32 %v709, %v711
        %v714 = vmax.f32 %v710, %v712
        %v715 = vstv %s551
        %v716 = vmul.f32 %v715, %v713
        %v717 = vmul.f32 %v715, %v714
        %v718 = vadd.f32 %v628, %v716
        %v719 = vadd.f32 %v629, %v717
        %720 = vset.pattern.permute.xlu0 17
        %721 = vperm.xlu0 %720, %v505
        %v722 = vpop.permute.xlu0 %721
        %724 = vset.pattern.permute.xlu0 17
        %725 = vperm.xlu0 %724, %v510
        %v726 = vpop.permute.xlu0 %725
        %v728 = vlaneseq
        %v729 = vshrl.u32 %v728, 7
        %v730 = vsub.s32 7, %v729
        %v731 = vrot.slane %v529, %v730
        %v732 = vadd.f32 %v722, %v731
        %v733 = vadd.f32 %v726, %v731
        %v734 = vmul.f32 %v732, 0.2
        %v735 = vmul.f32 %v733, 0.2
        %v736 = vmax.f32 %v732, %v734
        %v737 = vmax.f32 %v733, %v735
        %v738 = vstv %s552
        %v739 = vmul.f32 %v738, %v736
        %v740 = vmul.f32 %v738, %v737
        %v741 = vadd.f32 %v649, %v739
        %v742 = vadd.f32 %v650, %v740
        %743 = vset.pattern.permute.xlu0 18
        %744 = vperm.xlu0 %743, %v505
        %v745 = vpop.permute.xlu0 %744
        %747 = vset.pattern.permute.xlu0 18
        %748 = vperm.xlu0 %747, %v510
        %v749 = vpop.permute.xlu0 %748
        %v751 = vlaneseq
        %v752 = vshrl.u32 %v751, 7
        %v753 = vsub.s32 0, %v752
        %v754 = vrot.slane %v530, %v753
        %v755 = vadd.f32 %v745, %v754
        %v756 = vadd.f32 %v749, %v754
        %v757 = vmul.f32 %v755, 0.2
        %v758 = vmul.f32 %v756, 0.2
        %v759 = vmax.f32 %v755, %v757
        %v760 = vmax.f32 %v756, %v758
        %v761 = vstv %s553
        %v762 = vmul.f32 %v761, %v759
        %v763 = vmul.f32 %v761, %v760
        %v764 = vadd.f32 %v672, %v762
        %v765 = vadd.f32 %v673, %v763
        %766 = vset.pattern.permute.xlu0 19
        %767 = vperm.xlu0 %766, %v505
        %v768 = vpop.permute.xlu0 %767
        %770 = vset.pattern.permute.xlu0 19
        %771 = vperm.xlu0 %770, %v510
        %v772 = vpop.permute.xlu0 %771
        %v774 = vlaneseq
        %v775 = vshrl.u32 %v774, 7
        %v776 = vsub.s32 1, %v775
        %v777 = vrot.slane %v530, %v776
        %v778 = vadd.f32 %v768, %v777
        %v779 = vadd.f32 %v772, %v777
        %v780 = vmul.f32 %v778, 0.2
        %v781 = vmul.f32 %v779, 0.2
        %v782 = vmax.f32 %v778, %v780
        %v783 = vmax.f32 %v779, %v781
        %v784 = vstv %s554
        %v785 = vmul.f32 %v784, %v782
        %v786 = vmul.f32 %v784, %v783
        %v787 = vadd.f32 %v695, %v785
        %v788 = vadd.f32 %v696, %v786
        %v789 = vadd.f32 %v764, %v787
        %v790 = vadd.f32 %v765, %v788
        %v791 = vadd.f32 %v718, %v741
        %v792 = vadd.f32 %v719, %v742
        %v793 = vadd.f32 %v789, %v791
        %v794 = vadd.f32 %v790, %v792
        %v795 = vadd.f32 %v563, %v793
        %v796 = vadd.f32 %v564, %v794
        %vm797 = vcmask 97280
        %v798 = vsel %vm797, %v795, -inf
        %799 = vmax.xlane.f32.xlu0 %v798
        %v800 = vpop.xlane.xlu0 %799
        %vm801 = vcmask 93184
        %v802 = vsel %vm801, %v796, -inf
        %803 = vmax.xlane.f32.xlu0 %v802
        %v804 = vpop.xlane.xlu0 %803
        %v805 = vsub.f32 %v795, %v800
        %v806 = vsub.f32 %v796, %v804
        %v807 = vmul.f32 %v805, 1.442695
        %v808 = vpow.pop %v807
        %v809 = vmul.f32 %v806, 1.442695
        %v810 = vpow.pop %v809
        %v811 = vsel %vm797, %v808, 0.0
        %812 = vadd.xlane.f32.xlu0 %v811
        %v813 = vpop.xlane.xlu0 %812
        %v814 = vsel %vm801, %v810, 0.0
        %815 = vadd.xlane.f32.xlu0 %v814
        %v816 = vpop.xlane.xlu0 %815
        %v817 = vrcp.pop %v813
        %v818 = vrcp.pop %v816
        %v819 = vmul.f32 %v808, %v817
        %v820 = vmul.f32 %v810, %v818
        %v821 = vld [vmem:[%s5] sm:$0x1]
        %v823 = vlaneseq
        %v824 = vshrl.u32 %v823, 7
        %v825 = vsub.s32 0, %v824
        %v826 = vrot.slane %v821, %v825
        %v829 = vsel %vm797, %v819, 0
        %v832 = vsel %vm797, %v820, 0
        %vm834 = vcmask 1043456
        %v835 = vsel %vm834, %v510, 0
        %837 = vmatprep.subr.mxu0 0.0
        %838 = vmatpush1.msra.mxu0 %v505
        %839 = vmatprep.subr.mxu0 0.0
        %840 = vmatpush1.msra.mxu0 %v835
        %841 = vmatprep.subr.mxu0 0.0
        %842 = vmatpush1.msra.mxu0 0.0
        %843 = vmatprep.subr.mxu0 0.0
        %844 = vmatpush1.msra.mxu0 0.0
        %845 = vmatprep.subr.mxu0 0.0
        %846 = vmatpush1.msra.mxu0 0.0
        %847 = vmatprep.subr.mxu0 0.0
        %848 = vmatpush1.msra.mxu0 0.0
        %849 = vmatprep.subr.mxu0 0.0
        %850 = vmatpush1.msra.mxu0 0.0
        %851 = vmatprep.subr.mxu0 0.0
        %852 = vmatpush1.msra.mxu0 0.0
        %853 = vmatprep.subr.mxu0 0.0
        %854 = vmatpush1.msra.mxu0 0.0
        %855 = vmatprep.subr.mxu0 0.0
        %856 = vmatpush1.msra.mxu0 0.0
        %857 = vmatprep.subr.mxu0 0.0
        %858 = vmatpush1.msra.mxu0 0.0
        %859 = vmatprep.subr.mxu0 0.0
        %860 = vmatpush1.msra.mxu0 0.0
        %861 = vmatprep.subr.mxu0 0.0
        %862 = vmatpush1.msra.mxu0 0.0
        %863 = vmatprep.subr.mxu0 0.0
        %864 = vmatpush1.msra.mxu0 0.0
        %865 = vmatprep.subr.mxu0 0.0
        %866 = vmatpush1.msra.mxu0 0.0
        %867 = vmatprep.subr.mxu0 0.0
        %868 = vmatpush1.msra.mxu0 0.0
        %869 = vmatprep.subr.mxu0 0.0
        %870 = vmatpush1.msra.mxu0 0.0
        %871 = vmatprep.subr.mxu0 0.0
        %872 = vmatpush1.msra.mxu0 0.0
        %873 = vmatprep.subr.mxu0 0.0
        %874 = vmatpush1.msra.mxu0 0.0
        %875 = vmatprep.subr.mxu0 0.0
        %876 = vmatpush1.msra.mxu0 0.0
        %877 = vmatprep.subr.mxu0 0.0
        %878 = vmatpush1.msra.mxu0 0.0
        %879 = vmatprep.subr.mxu0 0.0
        %880 = vmatpush1.msra.mxu0 0.0
        %881 = vmatprep.subr.mxu0 0.0
        %882 = vmatpush1.msra.mxu0 0.0
        %883 = vmatprep.subr.mxu0 0.0
        %884 = vmatpush1.msra.mxu0 0.0
        %885 = vmatprep.subr.mxu0 0.0
        %886 = vmatpush1.msra.mxu0 0.0
        %887 = vmatprep.subr.mxu0 0.0
        %888 = vmatpush1.msra.mxu0 0.0
        %889 = vmatprep.subr.mxu0 0.0
        %890 = vmatpush1.msra.mxu0 0.0
        %891 = vmatprep.subr.mxu0 0.0
        %892 = vmatpush1.msra.mxu0 0.0
        %893 = vmatprep.subr.mxu0 0.0
        %894 = vmatpush1.msra.mxu0 0.0
        %895 = vmatprep.subr.mxu0 0.0
        %896 = vmatpush1.msra.mxu0 0.0
        %897 = vmatprep.subr.mxu0 0.0
        %898 = vmatpush1.msra.mxu0 0.0
        %899 = vmatprep.subr.mxu0 0.0
        %900 = vmatpush1.msra.mxu0 0.0
        %901 = vmatprep.mubr.f32.mxu0 0.0
        %902 = vmatmul.mubr.f32.gmra.mrb[0].mxu0 %v829
        %v903 = vpop.f32.mrb[0].mxu0
        %v904 = vadd.f32 %v826, %v903
        %v905 = vpop.f32.mrb[0].mxu0
        %906 = vmatprep.mubr.f32.mxu0 0.0
        %907 = vmatmul.mubr.f32.gmra.mrb[0].mxu0 %v832
        %v908 = vpop.f32.mrb[0].mxu0
        %v909 = vadd.f32 %v826, %v908
        %v910 = vpop.f32.mrb[0].mxu0
        %911 = vdwg.mxu0
        %v912 = vmax.f32 %v904, 0.0
        %v913 = vmax.f32 %v909, 0.0
        %v914 = vld [vmem:[%s419] sm:$0x3]
        %v916 = vsel %vm797, %v914, 0
        %v919 = vsel %vm834, %v913, 0
        %921 = vmatprep.subr.mxu0 0.0
        %922 = vmatpush1.msra.mxu0 %v912
        %923 = vmatprep.subr.mxu0 0.0
        %924 = vmatpush1.msra.mxu0 %v919
        %925 = vmatprep.subr.mxu0 0.0
        %926 = vmatpush1.msra.mxu0 0.0
        %927 = vmatprep.subr.mxu0 0.0
        %928 = vmatpush1.msra.mxu0 0.0
        %929 = vmatprep.subr.mxu0 0.0
        %930 = vmatpush1.msra.mxu0 0.0
        %931 = vmatprep.subr.mxu0 0.0
        %932 = vmatpush1.msra.mxu0 0.0
        %933 = vmatprep.subr.mxu0 0.0
        %934 = vmatpush1.msra.mxu0 0.0
        %935 = vmatprep.subr.mxu0 0.0
        %936 = vmatpush1.msra.mxu0 0.0
        %937 = vmatprep.subr.mxu0 0.0
        %938 = vmatpush1.msra.mxu0 0.0
        %939 = vmatprep.subr.mxu0 0.0
        %940 = vmatpush1.msra.mxu0 0.0
        %941 = vmatprep.subr.mxu0 0.0
        %942 = vmatpush1.msra.mxu0 0.0
        %943 = vmatprep.subr.mxu0 0.0
        %944 = vmatpush1.msra.mxu0 0.0
        %945 = vmatprep.subr.mxu0 0.0
        %946 = vmatpush1.msra.mxu0 0.0
        %947 = vmatprep.subr.mxu0 0.0
        %948 = vmatpush1.msra.mxu0 0.0
        %949 = vmatprep.subr.mxu0 0.0
        %950 = vmatpush1.msra.mxu0 0.0
        %951 = vmatprep.subr.mxu0 0.0
        %952 = vmatpush1.msra.mxu0 0.0
        %953 = vmatprep.subr.mxu0 0.0
        %954 = vmatpush1.msra.mxu0 0.0
        %955 = vmatprep.subr.mxu0 0.0
        %956 = vmatpush1.msra.mxu0 0.0
        %957 = vmatprep.subr.mxu0 0.0
        %958 = vmatpush1.msra.mxu0 0.0
        %959 = vmatprep.subr.mxu0 0.0
        %960 = vmatpush1.msra.mxu0 0.0
        %961 = vmatprep.subr.mxu0 0.0
        %962 = vmatpush1.msra.mxu0 0.0
        %963 = vmatprep.subr.mxu0 0.0
        %964 = vmatpush1.msra.mxu0 0.0
        %965 = vmatprep.subr.mxu0 0.0
        %966 = vmatpush1.msra.mxu0 0.0
        %967 = vmatprep.subr.mxu0 0.0
        %968 = vmatpush1.msra.mxu0 0.0
        %969 = vmatprep.subr.mxu0 0.0
        %970 = vmatpush1.msra.mxu0 0.0
        %971 = vmatprep.subr.mxu0 0.0
        %972 = vmatpush1.msra.mxu0 0.0
        %973 = vmatprep.subr.mxu0 0.0
        %974 = vmatpush1.msra.mxu0 0.0
        %975 = vmatprep.subr.mxu0 0.0
        %976 = vmatpush1.msra.mxu0 0.0
        %977 = vmatprep.subr.mxu0 0.0
        %978 = vmatpush1.msra.mxu0 0.0
        %979 = vmatprep.subr.mxu0 0.0
        %980 = vmatpush1.msra.mxu0 0.0
        %981 = vmatprep.subr.mxu0 0.0
        %982 = vmatpush1.msra.mxu0 0.0
        %983 = vmatprep.subr.mxu0 0.0
        %984 = vmatpush1.msra.mxu0 0.0
        %985 = vmatprep.mubr.f32.mxu0 0.0
        %986 = vmatmul.mubr.f32.gmra.mrb[0].mxu0 %v916
        %v987 = vpop.f32.mrb[0].mxu0
        %v988 = vadd.f32 0.0, %v987
        %v989 = vpop.f32.mrb[0].mxu0
        %990 = vdwg.mxu0
        %v991 = vld [vmem:[%s7] sm:$0xff]
        %v992 = vld [vmem:[%s7 + $0x8] sm:$0x3]
        %v993 = vld [vmem:[%s8] sm:$0x1]
        %v995 = vlaneseq
        %v996 = vshrl.u32 %v995, 7
        %v997 = vsub.s32 0, %v996
        %v998 = vrot.slane %v993, %v997
        %vm1000 = vcmask 80896
        %v1002 = vsel %vm1000, %v988, 0
        %vm1004 = vcmask 1041408
        %v1006 = vsel %vm1004, %v992, 0
        %1008 = vmatprep.subr.mxu0 0.0
        %1009 = vmatpush1.msra.mxu0 %v991
        %1010 = vmatprep.subr.mxu0 0.0
        %1011 = vmatpush1.msra.mxu0 %v1006
        %1012 = vmatprep.subr.mxu0 0.0
        %1013 = vmatpush1.msra.mxu0 0.0
        %1014 = vmatprep.subr.mxu0 0.0
        %1015 = vmatpush1.msra.mxu0 0.0
        %1016 = vmatprep.subr.mxu0 0.0
        %1017 = vmatpush1.msra.mxu0 0.0
        %1018 = vmatprep.subr.mxu0 0.0
        %1019 = vmatpush1.msra.mxu0 0.0
        %1020 = vmatprep.subr.mxu0 0.0
        %1021 = vmatpush1.msra.mxu0 0.0
        %1022 = vmatprep.subr.mxu0 0.0
        %1023 = vmatpush1.msra.mxu0 0.0
        %1024 = vmatprep.subr.mxu0 0.0
        %1025 = vmatpush1.msra.mxu0 0.0
        %1026 = vmatprep.subr.mxu0 0.0
        %1027 = vmatpush1.msra.mxu0 0.0
        %1028 = vmatprep.subr.mxu0 0.0
        %1029 = vmatpush1.msra.mxu0 0.0
        %1030 = vmatprep.subr.mxu0 0.0
        %1031 = vmatpush1.msra.mxu0 0.0
        %1032 = vmatprep.subr.mxu0 0.0
        %1033 = vmatpush1.msra.mxu0 0.0
        %1034 = vmatprep.subr.mxu0 0.0
        %1035 = vmatpush1.msra.mxu0 0.0
        %1036 = vmatprep.subr.mxu0 0.0
        %1037 = vmatpush1.msra.mxu0 0.0
        %1038 = vmatprep.subr.mxu0 0.0
        %1039 = vmatpush1.msra.mxu0 0.0
        %1040 = vmatprep.subr.mxu0 0.0
        %1041 = vmatpush1.msra.mxu0 0.0
        %1042 = vmatprep.subr.mxu0 0.0
        %1043 = vmatpush1.msra.mxu0 0.0
        %1044 = vmatprep.subr.mxu0 0.0
        %1045 = vmatpush1.msra.mxu0 0.0
        %1046 = vmatprep.subr.mxu0 0.0
        %1047 = vmatpush1.msra.mxu0 0.0
        %1048 = vmatprep.subr.mxu0 0.0
        %1049 = vmatpush1.msra.mxu0 0.0
        %1050 = vmatprep.subr.mxu0 0.0
        %1051 = vmatpush1.msra.mxu0 0.0
        %1052 = vmatprep.subr.mxu0 0.0
        %1053 = vmatpush1.msra.mxu0 0.0
        %1054 = vmatprep.subr.mxu0 0.0
        %1055 = vmatpush1.msra.mxu0 0.0
        %1056 = vmatprep.subr.mxu0 0.0
        %1057 = vmatpush1.msra.mxu0 0.0
        %1058 = vmatprep.subr.mxu0 0.0
        %1059 = vmatpush1.msra.mxu0 0.0
        %1060 = vmatprep.subr.mxu0 0.0
        %1061 = vmatpush1.msra.mxu0 0.0
        %1062 = vmatprep.subr.mxu0 0.0
        %1063 = vmatpush1.msra.mxu0 0.0
        %1064 = vmatprep.subr.mxu0 0.0
        %1065 = vmatpush1.msra.mxu0 0.0
        %1066 = vmatprep.subr.mxu0 0.0
        %1067 = vmatpush1.msra.mxu0 0.0
        %1068 = vmatprep.subr.mxu0 0.0
        %1069 = vmatpush1.msra.mxu0 0.0
        %1070 = vmatprep.subr.mxu0 0.0
        %1071 = vmatpush1.msra.mxu0 0.0
        %1072 = vmatprep.mubr.f32.mxu0 0.0
        %1073 = vmatmul.mubr.f32.gmra.mrb[0].mxu0 %v1002
        %v1074 = vpop.f32.mrb[0].mxu0
        %v1075 = vadd.f32 %v998, %v1074
        %v1076 = vpop.f32.mrb[0].mxu0
        %1077 = vdwg.mxu0
        %vm1078 = vcmask 25600
        %v1079 = vsel %vm1078, %v1075, -inf
        %1080 = vmax.xlane.f32.xlu0 %v1079
        %v1081 = vpop.xlane.xlu0 %1080
        %v1082 = vsub.f32 %v1075, %v1081
        %v1083 = vmul.f32 %v1082, 1.442695
        %v1084 = vpow.pop %v1083
        %v1085 = vsel %vm1078, %v1084, 0.0
        %1086 = vadd.xlane.f32.xlu0 %v1085
        %v1087 = vpop.xlane.xlu0 %1086
        %v1088 = vrcp.pop %v1087
        %v1089 = vmul.f32 %v1084, %v1088
        %1090 = vst.msk [vmem:[%s398] sm:$0x3] %vm1078, %v1089
        %vm1091 = vcmask 74752
        %1092 = vst.msk [vmem:[%s405] sm:$0x3] %vm1091, %v988
        %s1093 = sand.u32 %s241, 1
        %s1094 = scalar_lea.sflag [#allocation3], %s1093
        %s1095 = sand.u32 %s241, 1
        %s1096 = smul.addr %s1095, 2
        %s1097 = scalar_lea.vmem [#allocation5], %s1096
        %s1098 = sand.u32 %s267, 1
        %s1099 = scalar_lea.sflag [#allocation7], %s1098
        %s1100 = sand.u32 %s267, 1
        %s1101 = smul.addr %s1100, 2
        %s1102 = scalar_lea.vmem [#allocation6], %s1101
        // Predicated region
        $region61: #{tpu_custom_call.1} parent=55 // pred_check
          %p1103 = pneg %p251
        $region62: #{tpu_custom_call.1} parent=55 // pred_check_branch
          %1105 = sbr.rel (%p1103) target = $region64
        $region63: #{tpu_custom_call.1} parent=55 // pred_region
          %s1107 = ssub.s32 32, 32
          %1108 = vsyncadd %s1094, %s1107
          %s1109 = smul.addr %s29, 32
          %s1110 = scalar_lea.hbm %s9, %s1109
          %s1112 = sshll.u32 %s1097, 4
          %s1113 = int_to_ptr.vmem [resolvable:$true] %s1112
          %1115 = dma.vmem_to_hbm [thread:$0]  %s1113, 32, %s1110, %s1094
        $region64: #{tpu_custom_call.1} parent=55 // pred_fallthru
          _
        // Predicated region
        $region65: #{tpu_custom_call.1} parent=55 // pred_check
          %p1116 = pneg %p277
        $region66: #{tpu_custom_call.1} parent=55 // pred_check_branch
          %1118 = sbr.rel (%p1116) target = $region68
        $region67: #{tpu_custom_call.1} parent=55 // pred_region
          %s1120 = ssub.s32 32, 32
          %1121 = vsyncadd %s1099, %s1120
          %s1122 = smul.addr %s29, 32
          %s1123 = scalar_lea.hbm %s10, %s1122
          %s1125 = sshll.u32 %s1102, 4
          %s1126 = int_to_ptr.vmem [resolvable:$true] %s1125
          %1128 = dma.vmem_to_hbm [thread:$0]  %s1126, 32, %s1123, %s1099
        $region68: #{tpu_custom_call.1} parent=55 // pred_fallthru
          _
      $region56: #{tpu_custom_call.1} parent=5 // pred_fallthru
        _
      %p1129 = scmp.le.s32.totalorder 2, %s24
      // Predicated region
      $region69: #{tpu_custom_call.1} parent=5 // pred_check
        %p1130 = pneg %p1129
      $region70: #{tpu_custom_call.1} parent=5 // pred_check_branch
        %1132 = sbr.rel (%p1130) target = $region72
      $region71: #{tpu_custom_call.1} parent=5 // pred_region
        %s1133 = ssub.s32 %s24, 2
        // Predicated region
        $region73: #{tpu_custom_call.1} parent=71 // pred_check
          %p1134 = pneg %p257
        $region74: #{tpu_custom_call.1} parent=71 // pred_check_branch
          %1136 = sbr.rel (%p1134) target = $region76
        $region75: #{tpu_custom_call.1} parent=71 // pred_region
          %s1137 = sand.u32 %s242, 1
          %s1138 = scalar_lea.sflag [#allocation3], %s1137
          %s1139 = sand.u32 %s242, 1
          %s1140 = smul.addr %s1139, 2
          %s1141 = scalar_lea.vmem [#allocation5], %s1140
          %1142 = dma.done %s1138, 32
        $region76: #{tpu_custom_call.1} parent=71 // pred_fallthru
          _
        // Predicated region
        $region77: #{tpu_custom_call.1} parent=71 // pred_check
          %p1143 = pneg %p283
        $region78: #{tpu_custom_call.1} parent=71 // pred_check_branch
          %1145 = sbr.rel (%p1143) target = $region80
        $region79: #{tpu_custom_call.1} parent=71 // pred_region
          %s1146 = sand.u32 %s268, 1
          %s1147 = scalar_lea.sflag [#allocation7], %s1146
          %s1148 = sand.u32 %s268, 1
          %s1149 = smul.addr %s1148, 2
          %s1150 = scalar_lea.vmem [#allocation6], %s1149
          %1151 = dma.done %s1147, 32
        $region80: #{tpu_custom_call.1} parent=71 // pred_fallthru
          _
      $region72: #{tpu_custom_call.1} parent=5 // pred_fallthru
        _
    $region6: #{tpu_custom_call.1} parent=1 // loop_footer
      %s28 = sadd.s32 1, %s24
    $region7: #{tpu_custom_call.1} parent=1 // loop_footer_branch
      %23 = sbr.rel target = $region3
    $region8: #{tpu_custom_call.1} parent=1 // loop_exit
      _
    %1152 = vsyncpa [#allocation3], 1
    %s1153 = scalar_lea.sflag [#allocation3], 1
    %1154 = vsyncpa %s1153, 1
    %1155 = vsyncpa [#allocation7], 1
    %s1156 = scalar_lea.sflag [#allocation7], 1
    %1157 = vsyncpa %s1156, 1
    %1158 = vsyncpa [#allocation4], 1
    %s1159 = scalar_lea.sflag [#allocation4], 1
    %1160 = vsyncpa %s1159, 1

</llo_original>
